<compile_context>
chip_gen: v5e
topology: v5e:2x2
jax: 0.10.0
libtpu: 0.0.40
codegen_flags: <defaults>
</compile_context>

<pallas_src>
import functools

import jax
import jax.numpy as jnp
from jax.experimental import pallas as pl
from jax.experimental.pallas import tpu as pltpu

LN_EPS_AST = 1e-12    # HF AST / ViT layer_norm_eps
LN_EPS_TORCH = 1e-5   # torch.nn.LayerNorm default (regressor head)


# ----------------------------------------------------------------------------
# in-kernel helpers (all f32 math)
# ----------------------------------------------------------------------------
def _layer_norm(x, g, b, eps):
    mu = jnp.mean(x, axis=-1, keepdims=True)
    var = jnp.mean(jnp.square(x - mu), axis=-1, keepdims=True)
    return (x - mu) * jax.lax.rsqrt(var + eps) * g + b


def _gelu(x):
    # TODO(synk): HF AST uses exact (erf) GELU; tanh approximation used here.
    return jax.nn.gelu(x, approximate=True)


# ----------------------------------------------------------------------------
# fused backbone kernel: patch-embed + tokens/pos + L encoder layers
# grid = (B, L); one (1, S, H) activation block resident across the L axis.
# ----------------------------------------------------------------------------
def _encoder_stack_kernel(num_heads,
                          base_ref, patch_ref, pw_ref, pb_ref,
                          ln1g_ref, ln1b_ref, wqkv_ref, bqkv_ref,
                          wo_ref, bo_ref, ln2g_ref, ln2b_ref,
                          w1_ref, b1_ref, w2_ref, b2_ref,
                          o_ref):
    l = pl.program_id(1)                       # layer index (inner, arbitrary)
    S = o_ref.shape[1]
    H = o_ref.shape[2]
    nh = num_heads
    dh = H // nh
    scale = 1.0 / (dh ** 0.5)

    # ---- first layer step: build the token sequence into the resident block.
    @pl.when(l == 0)
    def _():
        p = patch_ref[0]                                             # (P, PD) bf16
        emb = (jnp.dot(p, pw_ref[...],
                       preferred_element_type=jnp.float32)
               + pb_ref[...])                                        # (P, H) f32
        emb_pad = jnp.concatenate(
            [jnp.zeros((2, H), jnp.float32), emb], axis=0)           # (S, H)
        # base = [cls; dist; 0] + pos_embed   (precomputed parameter tensor)
        o_ref[0] = base_ref[0] + emb_pad

    x = o_ref[0]                                                     # (S, H) f32

    # --- self-attention block (pre-LN) ---
    xn = _layer_norm(x, ln1g_ref[0], ln1b_ref[0], LN_EPS_AST)
    qkv = (jnp.dot(xn.astype(jnp.bfloat16), wqkv_ref[0],
                   preferred_element_type=jnp.float32)
           + bqkv_ref[0])                                            # (S, 3H) f32
    q = qkv[:, 0 * H:1 * H]
    k = qkv[:, 1 * H:2 * H]
    v = qkv[:, 2 * H:3 * H]

    # head-batched attention: (nh, S, dh) operands, two batched MXU einsums
    q_h = jnp.stack([q[:, h * dh:(h + 1) * dh] for h in range(nh)],
                    axis=0).astype(jnp.bfloat16)
    k_h = jnp.stack([k[:, h * dh:(h + 1) * dh] for h in range(nh)],
                    axis=0).astype(jnp.bfloat16)
    v_h = jnp.stack([v[:, h * dh:(h + 1) * dh] for h in range(nh)],
                    axis=0).astype(jnp.bfloat16)

    s = jnp.einsum('nsd,ntd->nst', q_h, k_h,
                   preferred_element_type=jnp.float32) * scale       # (nh,S,S) f32
    m = jnp.max(s, axis=-1, keepdims=True)
    p = jnp.exp(s - m)
    denom = jnp.sum(p, axis=-1, keepdims=True)
    p = p * pl.reciprocal(denom, approx=True)                        # EUP, not VPU div
    ctx = jnp.einsum('nst,ntd->nsd', p.astype(jnp.bfloat16), v_h,
                     preferred_element_type=jnp.float32)             # (nh,S,dh) f32

    attn = jnp.concatenate([ctx[h] for h in range(nh)], axis=-1)     # (S, H) f32
    attn = (jnp.dot(attn.astype(jnp.bfloat16), wo_ref[0],
                    preferred_element_type=jnp.float32)
            + bo_ref[0])
    x = x + attn                                                     # residual 1

    # --- MLP block (pre-LN) ---
    xn2 = _layer_norm(x, ln2g_ref[0], ln2b_ref[0], LN_EPS_AST)
    hmid = _gelu(jnp.dot(xn2.astype(jnp.bfloat16), w1_ref[0],
                         preferred_element_type=jnp.float32)
                 + b1_ref[0])
    ffn = (jnp.dot(hmid.astype(jnp.bfloat16), w2_ref[0],
                   preferred_element_type=jnp.float32)
           + b2_ref[0])
    o_ref[0] = x + ffn                                               # residual 2


# ----------------------------------------------------------------------------
# head kernel: final AST LayerNorm -> mean pool over seq -> regressor head
# ----------------------------------------------------------------------------
def _head_kernel(x_ref, lnfg_ref, lnfb_ref, lnrg_ref, lnrb_ref,
                 w1_ref, b1_ref, w2_ref, b2_ref, o_ref):
    x = x_ref[...]                                                   # (B, S, H) f32
    xn = _layer_norm(x, lnfg_ref[...], lnfb_ref[...], LN_EPS_AST)    # ASTModel.layernorm
    pooled = jnp.mean(xn, axis=1)                                    # mean(dim=1) -> (B, H)
    pn = _layer_norm(pooled, lnrg_ref[...], lnrb_ref[...], LN_EPS_TORCH)
    # Dropout layers are identity at inference.
    h1 = jnp.maximum(
        jnp.dot(pn, w1_ref[...], preferred_element_type=jnp.float32)
        + b1_ref[...], 0.0)                                          # ReLU, (B, H//2)
    # final (H//2 -> 1) projection as a VPU reduction (avoid N=1 MXU matmul)
    logit = jnp.sum(h1 * w2_ref[...], axis=-1, keepdims=True) + b2_ref[...]
    o_ref[...] = jax.nn.sigmoid(logit)                               # (B, 1)


# ----------------------------------------------------------------------------
# pallas_call wrappers
# ----------------------------------------------------------------------------
def encoder_stack_call(base, patches, params, *, num_heads):
    B, P, PD = patches.shape
    _, S, H = base.shape
    L = params["wqkv"].shape[0]
    I = params["w1"].shape[2]

    def const2(shape):
        return pl.BlockSpec(shape, lambda b, l: (0, 0))

    def const3(shape):
        return pl.BlockSpec(shape, lambda b, l: (0, 0, 0))

    def per_layer(shape):            # stacked (L, ...) weights, block index = layer
        return pl.BlockSpec(shape, lambda b, l: (l, 0, 0))

    in_specs = [
        const3((1, S, H)),                                  # base (cls/dist + pos)
        pl.BlockSpec((1, P, PD), lambda b, l: (b, 0, 0)),   # patches for this batch elem
        const2((PD, H)), const2((1, H)),                    # patch embed W, b
        per_layer((1, 1, H)), per_layer((1, 1, H)),         # ln1 gamma / beta
        per_layer((1, H, 3 * H)), per_layer((1, 1, 3 * H)), # fused qkv W, b
        per_layer((1, H, H)), per_layer((1, 1, H)),         # attn out proj W, b
        per_layer((1, 1, H)), per_layer((1, 1, H)),         # ln2 gamma / beta
        per_layer((1, H, I)), per_layer((1, 1, I)),         # ffn in W, b
        per_layer((1, I, H)), per_layer((1, 1, H)),         # ffn out W, b
    ]
    # constant over the layer axis -> activation stays resident in VMEM
    out_spec = pl.BlockSpec((1, S, H), lambda b, l: (b, 0, 0))

    kernel = functools.partial(_encoder_stack_kernel, num_heads)
    return pl.pallas_call(
        kernel,
        out_shape=jax.ShapeDtypeStruct((B, S, H), jnp.float32),
        grid=(B, L),
        in_specs=in_specs,
        out_specs=out_spec,
        compiler_params=pltpu.CompilerParams(
            dimension_semantics=("parallel", "arbitrary"),
            vmem_limit_bytes=48 * 1024 * 1024),
    )(base, patches,
      params["patch_w"], params["patch_b"],
      params["ln1_g"], params["ln1_b"], params["wqkv"], params["bqkv"],
      params["wo"], params["bo"], params["ln2_g"], params["ln2_b"],
      params["w1"], params["b1"], params["w2"], params["b2"])


def head_call(seq, params):
    B = seq.shape[0]
    return pl.pallas_call(
        _head_kernel,
        out_shape=jax.ShapeDtypeStruct((B, 1), jnp.float32),
    )(seq, params["lnf_g"], params["lnf_b"], params["lnr_g"], params["lnr_b"],
      params["rw1"], params["rb1"], params["rw2"], params["rb2"])


# ----------------------------------------------------------------------------
# full forward
# ----------------------------------------------------------------------------
def ast_highlight_regressor_forward(x, params, *, num_heads, patch_t, patch_m):
    B, T, M = x.shape
    H = params["patch_w"].shape[1]
    nt, nm = T // patch_t, M // patch_m
    P = nt * nm

    # TODO(synk): real AST patch-embed is an overlapping Conv2d(16x16, stride 10);
    # simplified here to non-overlapping patches (reshape + matmul).
    patches = x.reshape(B, nt, patch_t, nm, patch_m)
    patches = patches.transpose(0, 1, 3, 2, 4).reshape(B, P, patch_t * patch_m)
    patches = patches.astype(jnp.bfloat16)

    # Fold cls/dist tokens + positional embedding into one parameter tensor so
    # the (B, S, H) sequence is never materialized in HBM before the backbone.
    base = (jnp.concatenate(
        [params["cls_token"], params["dist_token"],
         jnp.zeros((1, P, H), jnp.float32)], axis=1)
        + params["pos_embed"])                         # (1, S, H) f32

    seq = encoder_stack_call(base, patches, params, num_heads=num_heads)
    out = head_call(seq, params)                       # (B, 1)
    return out[:, 0]                                   # .squeeze(-1) -> (B,)


# ----------------------------------------------------------------------------
# deterministic parameter init (synthetic stand-in for the AST checkpoint)
# Layer weights are STACKED with a leading L dim; matmul weights are bf16.
# ----------------------------------------------------------------------------
def init_params(key, *, n_mels, max_frames, patch_t, patch_m,
                hidden, num_layers, num_heads, intermediate):
    del num_heads
    P = (max_frames // patch_t) * (n_mels // patch_m)
    S = P + 2
    PD = patch_t * patch_m
    L = num_layers
    keys = jax.random.split(key, 12)

    def norm(k, shape, scale=0.02, dtype=jnp.float32):
        return (scale * jax.random.normal(k, shape, jnp.float32)).astype(dtype)

    params = dict(
        patch_w=norm(keys[0], (PD, hidden), dtype=jnp.bfloat16),
        patch_b=jnp.zeros((1, hidden), jnp.float32),
        cls_token=norm(keys[1], (1, 1, hidden)),
        dist_token=norm(keys[2], (1, 1, hidden)),
        pos_embed=norm(keys[3], (1, S, hidden)),
        # final AST layernorm
        lnf_g=jnp.ones((1, hidden), jnp.float32),
        lnf_b=jnp.zeros((1, hidden), jnp.float32),
        # regressor head: LayerNorm, Linear(H, H//2), Linear(H//2, 1)
        lnr_g=jnp.ones((1, hidden), jnp.float32),
        lnr_b=jnp.zeros((1, hidden), jnp.float32),
        rw1=norm(keys[4], (hidden, hidden // 2)),
        rb1=jnp.zeros((1, hidden // 2), jnp.float32),
        rw2=norm(keys[5], (1, hidden // 2)),           # row vector (torch weight layout)
        rb2=jnp.zeros((1, 1), jnp.float32),
        # stacked encoder layer params (leading dim = L)
        ln1_g=jnp.ones((L, 1, hidden), jnp.float32),
        ln1_b=jnp.zeros((L, 1, hidden), jnp.float32),
        wqkv=norm(keys[6], (L, hidden, 3 * hidden), dtype=jnp.bfloat16),
        bqkv=jnp.zeros((L, 1, 3 * hidden), jnp.float32),
        wo=norm(keys[7], (L, hidden, hidden), dtype=jnp.bfloat16),
        bo=jnp.zeros((L, 1, hidden), jnp.float32),
        ln2_g=jnp.ones((L, 1, hidden), jnp.float32),
        ln2_b=jnp.zeros((L, 1, hidden), jnp.float32),
        w1=norm(keys[8], (L, hidden, intermediate), dtype=jnp.bfloat16),
        b1=jnp.zeros((L, 1, intermediate), jnp.float32),
        w2=norm(keys[9], (L, intermediate, hidden), dtype=jnp.bfloat16),
        b2=jnp.zeros((L, 1, hidden), jnp.float32),
    )
    return params


# ----------------------------------------------------------------------------
if __name__ == "__main__":
    B, T, M = 2, 16, 16          # batch, max_frames, n_mels
    PT = PM = 8                  # patch size -> 4 patches, seq = 6 with cls/dist
    H, L, NH, I = 32, 2, 2, 64   # hidden, layers, heads, intermediate

    key = jax.random.PRNGKey(0)
    kx, kp = jax.random.split(key)
    x = jax.random.normal(kx, (B, T, M), jnp.float32)
    params = init_params(kp, n_mels=M, max_frames=T, patch_t=PT, patch_m=PM,
                         hidden=H, num_layers=L, num_heads=NH, intermediate=I)

    y = ast_highlight_regressor_forward(x, params, num_heads=NH,
                                        patch_t=PT, patch_m=PM)
    y = jax.block_until_ready(y)
    assert y.shape == (B,)
    assert bool(jnp.all((y >= 0.0) & (y <= 1.0)))   # sigmoid output range
    print("KERNEL_OK")
</pallas_src>

<mosaic_0001>
module attributes {stable_mosaic.version = 11 : i64} {
  func.func @_encoder_stack_kernel(%arg0: i32, %arg1: i32, %arg2: memref<1x6x32xf32, #tpu.memory_space<vmem>>, %arg3: memref<1x4x64xbf16, #tpu.memory_space<vmem>>, %arg4: memref<64x32xbf16, #tpu.memory_space<vmem>>, %arg5: memref<1x32xf32, #tpu.memory_space<vmem>>, %arg6: memref<1x1x32xf32, #tpu.memory_space<vmem>>, %arg7: memref<1x1x32xf32, #tpu.memory_space<vmem>>, %arg8: memref<1x32x96xbf16, #tpu.memory_space<vmem>>, %arg9: memref<1x1x96xf32, #tpu.memory_space<vmem>>, %arg10: memref<1x32x32xbf16, #tpu.memory_space<vmem>>, %arg11: memref<1x1x32xf32, #tpu.memory_space<vmem>>, %arg12: memref<1x1x32xf32, #tpu.memory_space<vmem>>, %arg13: memref<1x1x32xf32, #tpu.memory_space<vmem>>, %arg14: memref<1x32x64xbf16, #tpu.memory_space<vmem>>, %arg15: memref<1x1x64xf32, #tpu.memory_space<vmem>>, %arg16: memref<1x64x32xbf16, #tpu.memory_space<vmem>>, %arg17: memref<1x1x32xf32, #tpu.memory_space<vmem>>, %arg18: memref<1x6x32xf32, #tpu.memory_space<vmem>>) attributes {dimension_semantics = [#tpu.dimension_semantics<parallel>, #tpu.dimension_semantics<arbitrary>], iteration_bounds = array<i64: 2, 2>, scalar_prefetch = 0 : i64, scratch_operands = 0 : i64, tpu.core_type = #tpu.core_type<tc>, window_params = [{pipeline_mode = #tpu.pipeline_mode<synchronous>, transform_indices = @transform_0, window_bounds = array<i64: 1, 6, 32>}, {transform_indices = @transform_1, window_bounds = array<i64: 1, 4, 64>}, {pipeline_mode = #tpu.pipeline_mode<synchronous>, transform_indices = @transform_2, window_bounds = array<i64: 64, 32>}, {pipeline_mode = #tpu.pipeline_mode<synchronous>, transform_indices = @transform_3, window_bounds = array<i64: 1, 32>}, {transform_indices = @transform_4, window_bounds = array<i64: 1, 1, 32>}, {transform_indices = @transform_5, window_bounds = array<i64: 1, 1, 32>}, {transform_indices = @transform_6, window_bounds = array<i64: 1, 32, 96>}, {transform_indices = @transform_7, window_bounds = array<i64: 1, 1, 96>}, {transform_indices = @transform_8, window_bounds = array<i64: 1, 32, 32>}, {transform_indices = @transform_9, window_bounds = array<i64: 1, 1, 32>}, {transform_indices = @transform_10, window_bounds = array<i64: 1, 1, 32>}, {transform_indices = @transform_11, window_bounds = array<i64: 1, 1, 32>}, {transform_indices = @transform_12, window_bounds = array<i64: 1, 32, 64>}, {transform_indices = @transform_13, window_bounds = array<i64: 1, 1, 64>}, {transform_indices = @transform_14, window_bounds = array<i64: 1, 64, 32>}, {transform_indices = @transform_15, window_bounds = array<i64: 1, 1, 32>}, {transform_indices = @transform_16, window_bounds = array<i64: 1, 6, 32>}]} {
    %c0_i32 = arith.constant 0 : i32
    %0 = arith.cmpi eq, %arg1, %c0_i32 : i32
    %1 = arith.extui %0 : i1 to i32
    %c0_i32_0 = arith.constant 0 : i32
    %2 = arith.cmpi ne, %1, %c0_i32_0 : i32
    scf.if %2 {
      %c0_64 = arith.constant 0 : index
      %c0_65 = arith.constant 0 : index
      %c0_66 = arith.constant 0 : index
      %148 = vector.load %arg3[%c0_64, %c0_65, %c0_66] : memref<1x4x64xbf16, #tpu.memory_space<vmem>>, vector<1x4x64xbf16>
      %149 = vector.shape_cast %148 : vector<1x4x64xbf16> to vector<4x64xbf16>
      %c0_67 = arith.constant 0 : index
      %c0_68 = arith.constant 0 : index
      %150 = vector.load %arg4[%c0_67, %c0_68] : memref<64x32xbf16, #tpu.memory_space<vmem>>, vector<64x32xbf16>
      %cst_69 = arith.constant dense<0.000000e+00> : vector<4x32xf32>
      %151 = tpu.matmul %149, %150, %cst_69 {dimension_numbers = #tpu.dot_dimension_numbers<[1], [0], [0], [1], [0, 0, 1, 1], [], []>} : vector<4x64xbf16>, vector<64x32xbf16>, vector<4x32xf32> -> vector<4x32xf32>
      %c0_70 = arith.constant 0 : index
      %c0_71 = arith.constant 0 : index
      %152 = vector.load %arg5[%c0_70, %c0_71] : memref<1x32xf32, #tpu.memory_space<vmem>>, vector<1x32xf32>
      %153 = vector.broadcast %152 : vector<1x32xf32> to vector<4x32xf32>
      %154 = arith.addf %151, %153 : vector<4x32xf32>
      %cst_72 = arith.constant 0.000000e+00 : f32
      %155 = vector.broadcast %cst_72 : f32 to vector<2x32xf32>
      %156 = tpu.concatenate %155, %154 in 0 : vector<2x32xf32>, vector<4x32xf32> -> vector<6x32xf32>
      %c0_73 = arith.constant 0 : index
      %c0_74 = arith.constant 0 : index
      %c0_75 = arith.constant 0 : index
      %157 = vector.load %arg2[%c0_73, %c0_74, %c0_75] : memref<1x6x32xf32, #tpu.memory_space<vmem>>, vector<1x6x32xf32>
      %158 = vector.shape_cast %157 : vector<1x6x32xf32> to vector<6x32xf32>
      %159 = arith.addf %158, %156 : vector<6x32xf32>
      %c0_76 = arith.constant 0 : index
      %c0_77 = arith.constant 0 : index
      %c0_78 = arith.constant 0 : index
      %160 = vector.load %arg18[%c0_76, %c0_77, %c0_78] : memref<1x6x32xf32, #tpu.memory_space<vmem>>, vector<1x6x32xf32>
      %161 = vector.shape_cast %160 : vector<1x6x32xf32> to vector<6x32xf32>
      %162 = vector.shape_cast %159 : vector<6x32xf32> to vector<1x6x32xf32>
      tpu.vector_store %arg18[%c0_76, %c0_77, %c0_78], %162 {strides = array<i32>} : memref<1x6x32xf32, #tpu.memory_space<vmem>>, vector<1x6x32xf32>,
    } else {
    }
    %c0 = arith.constant 0 : index
    %c0_1 = arith.constant 0 : index
    %c0_2 = arith.constant 0 : index
    %3 = vector.load %arg18[%c0, %c0_1, %c0_2] : memref<1x6x32xf32, #tpu.memory_space<vmem>>, vector<1x6x32xf32>
    %4 = vector.shape_cast %3 : vector<1x6x32xf32> to vector<6x32xf32>
    %c0_3 = arith.constant 0 : index
    %c0_4 = arith.constant 0 : index
    %c0_5 = arith.constant 0 : index
    %5 = vector.load %arg6[%c0_3, %c0_4, %c0_5] : memref<1x1x32xf32, #tpu.memory_space<vmem>>, vector<1x1x32xf32>
    %6 = vector.shape_cast %5 : vector<1x1x32xf32> to vector<1x32xf32>
    %c0_6 = arith.constant 0 : index
    %c0_7 = arith.constant 0 : index
    %c0_8 = arith.constant 0 : index
    %7 = vector.load %arg7[%c0_6, %c0_7, %c0_8] : memref<1x1x32xf32, #tpu.memory_space<vmem>>, vector<1x1x32xf32>
    %8 = vector.shape_cast %7 : vector<1x1x32xf32> to vector<1x32xf32>
    %cst = arith.constant dense<0.000000e+00> : vector<6xf32>
    %9 = vector.multi_reduction <add>, %4, %cst [1] : vector<6x32xf32> to vector<6xf32>
    %10 = vector.shape_cast %9 : vector<6xf32> to vector<6x1xf32>
    %cst_9 = arith.constant 3.200000e+01 : f32
    %11 = vector.broadcast %cst_9 : f32 to vector<6x1xf32>
    %12 = arith.divf %10, %11 : vector<6x1xf32>
    %13 = vector.broadcast %12 : vector<6x1xf32> to vector<6x32xf32>
    %14 = arith.subf %4, %13 : vector<6x32xf32>
    %15 = arith.mulf %14, %14 : vector<6x32xf32>
    %cst_10 = arith.constant dense<0.000000e+00> : vector<6xf32>
    %16 = vector.multi_reduction <add>, %15, %cst_10 [1] : vector<6x32xf32> to vector<6xf32>
    %17 = vector.shape_cast %16 : vector<6xf32> to vector<6x1xf32>
    %cst_11 = arith.constant 3.200000e+01 : f32
    %18 = vector.broadcast %cst_11 : f32 to vector<6x1xf32>
    %19 = arith.divf %17, %18 : vector<6x1xf32>
    %20 = vector.broadcast %12 : vector<6x1xf32> to vector<6x32xf32>
    %21 = arith.subf %4, %20 : vector<6x32xf32>
    %cst_12 = arith.constant 9.99999996E-13 : f32
    %22 = vector.broadcast %cst_12 : f32 to vector<6x1xf32>
    %23 = arith.addf %19, %22 : vector<6x1xf32>
    %24 = math.rsqrt %23 : vector<6x1xf32>
    %25 = vector.broadcast %24 : vector<6x1xf32> to vector<6x32xf32>
    %26 = arith.mulf %21, %25 : vector<6x32xf32>
    %27 = vector.broadcast %6 : vector<1x32xf32> to vector<6x32xf32>
    %28 = arith.mulf %26, %27 : vector<6x32xf32>
    %29 = vector.broadcast %8 : vector<1x32xf32> to vector<6x32xf32>
    %30 = arith.addf %28, %29 : vector<6x32xf32>
    %31 = arith.truncf %30 : vector<6x32xf32> to vector<6x32xbf16>
    %c0_13 = arith.constant 0 : index
    %c0_14 = arith.constant 0 : index
    %c0_15 = arith.constant 0 : index
    %32 = vector.load %arg8[%c0_13, %c0_14, %c0_15] : memref<1x32x96xbf16, #tpu.memory_space<vmem>>, vector<1x32x96xbf16>
    %33 = vector.shape_cast %32 : vector<1x32x96xbf16> to vector<32x96xbf16>
    %cst_16 = arith.constant dense<0.000000e+00> : vector<6x96xf32>
    %34 = tpu.matmul %31, %33, %cst_16 {dimension_numbers = #tpu.dot_dimension_numbers<[1], [0], [0], [1], [0, 0, 1, 1], [], []>} : vector<6x32xbf16>, vector<32x96xbf16>, vector<6x96xf32> -> vector<6x96xf32>
    %c0_17 = arith.constant 0 : index
    %c0_18 = arith.constant 0 : index
    %c0_19 = arith.constant 0 : index
    %35 = vector.load %arg9[%c0_17, %c0_18, %c0_19] : memref<1x1x96xf32, #tpu.memory_space<vmem>>, vector<1x1x96xf32>
    %36 = vector.shape_cast %35 : vector<1x1x96xf32> to vector<1x96xf32>
    %37 = vector.broadcast %36 : vector<1x96xf32> to vector<6x96xf32>
    %38 = arith.addf %34, %37 : vector<6x96xf32>
    %39 = vector.extract_strided_slice %38 {offsets = [0, 0], sizes = [6, 32], strides = [1, 1]} : vector<6x96xf32> to vector<6x32xf32>
    %40 = vector.extract_strided_slice %38 {offsets = [0, 32], sizes = [6, 32], strides = [1, 1]} : vector<6x96xf32> to vector<6x32xf32>
    %41 = vector.extract_strided_slice %38 {offsets = [0, 64], sizes = [6, 32], strides = [1, 1]} : vector<6x96xf32> to vector<6x32xf32>
    %42 = vector.extract_strided_slice %39 {offsets = [0, 0], sizes = [6, 16], strides = [1, 1]} : vector<6x32xf32> to vector<6x16xf32>
    %43 = vector.extract_strided_slice %39 {offsets = [0, 16], sizes = [6, 16], strides = [1, 1]} : vector<6x32xf32> to vector<6x16xf32>
    %44 = vector.shape_cast %42 : vector<6x16xf32> to vector<1x6x16xf32>
    %45 = vector.shape_cast %43 : vector<6x16xf32> to vector<1x6x16xf32>
    %46 = tpu.concatenate %44, %45 in 0 : vector<1x6x16xf32>, vector<1x6x16xf32> -> vector<2x6x16xf32>
    %47 = arith.truncf %46 : vector<2x6x16xf32> to vector<2x6x16xbf16>
    %48 = vector.extract_strided_slice %40 {offsets = [0, 0], sizes = [6, 16], strides = [1, 1]} : vector<6x32xf32> to vector<6x16xf32>
    %49 = vector.extract_strided_slice %40 {offsets = [0, 16], sizes = [6, 16], strides = [1, 1]} : vector<6x32xf32> to vector<6x16xf32>
    %50 = vector.shape_cast %48 : vector<6x16xf32> to vector<1x6x16xf32>
    %51 = vector.shape_cast %49 : vector<6x16xf32> to vector<1x6x16xf32>
    %52 = tpu.concatenate %50, %51 in 0 : vector<1x6x16xf32>, vector<1x6x16xf32> -> vector<2x6x16xf32>
    %53 = arith.truncf %52 : vector<2x6x16xf32> to vector<2x6x16xbf16>
    %54 = vector.extract_strided_slice %41 {offsets = [0, 0], sizes = [6, 16], strides = [1, 1]} : vector<6x32xf32> to vector<6x16xf32>
    %55 = vector.extract_strided_slice %41 {offsets = [0, 16], sizes = [6, 16], strides = [1, 1]} : vector<6x32xf32> to vector<6x16xf32>
    %56 = vector.shape_cast %54 : vector<6x16xf32> to vector<1x6x16xf32>
    %57 = vector.shape_cast %55 : vector<6x16xf32> to vector<1x6x16xf32>
    %58 = tpu.concatenate %56, %57 in 0 : vector<1x6x16xf32>, vector<1x6x16xf32> -> vector<2x6x16xf32>
    %59 = arith.truncf %58 : vector<2x6x16xf32> to vector<2x6x16xbf16>
    "tpu.trace_start"() <{level = 10 : i32, message = "nsd,ntd->nst"}> : () -> ()
    %cst_20 = arith.constant dense<0.000000e+00> : vector<2x6x6xf32>
    %60 = tpu.matmul %47, %53, %cst_20 {dimension_numbers = #tpu.dot_dimension_numbers<[2], [2], [1], [1], [0, 0, 0, 1, 1, 1], [0], [0]>} : vector<2x6x16xbf16>, vector<2x6x16xbf16>, vector<2x6x6xf32> -> vector<2x6x6xf32>
    "tpu.trace_stop"() : () -> ()
    %cst_21 = arith.constant 2.500000e-01 : f32
    %61 = vector.broadcast %cst_21 : f32 to vector<2x6x6xf32>
    %62 = arith.mulf %60, %61 : vector<2x6x6xf32>
    %cst_22 = arith.constant dense<0xFF800000> : vector<2x6xf32>
    %63 = vector.multi_reduction <maximumf>, %62, %cst_22 [2] : vector<2x6x6xf32> to vector<2x6xf32>
    %64 = vector.shape_cast %63 : vector<2x6xf32> to vector<2x6x1xf32>
    %65 = vector.broadcast %64 : vector<2x6x1xf32> to vector<2x6x6xf32>
    %66 = arith.subf %62, %65 : vector<2x6x6xf32>
    %67 = math.exp %66 : vector<2x6x6xf32>
    %cst_23 = arith.constant dense<0.000000e+00> : vector<2x6xf32>
    %68 = vector.multi_reduction <add>, %67, %cst_23 [2] : vector<2x6x6xf32> to vector<2x6xf32>
    %69 = vector.shape_cast %68 : vector<2x6xf32> to vector<2x6x1xf32>
    %70 = tpu.reciprocal %69 {approx = true} : vector<2x6x1xf32> -> vector<2x6x1xf32>
    %71 = vector.broadcast %70 : vector<2x6x1xf32> to vector<2x6x6xf32>
    %72 = arith.mulf %67, %71 : vector<2x6x6xf32>
    %73 = arith.truncf %72 : vector<2x6x6xf32> to vector<2x6x6xbf16>
    "tpu.trace_start"() <{level = 10 : i32, message = "nst,ntd->nsd"}> : () -> ()
    %cst_24 = arith.constant dense<0.000000e+00> : vector<2x6x16xf32>
    %74 = tpu.matmul %73, %59, %cst_24 {dimension_numbers = #tpu.dot_dimension_numbers<[2], [1], [1], [2], [0, 0, 0, 1, 1, 2], [0], [0]>} : vector<2x6x6xbf16>, vector<2x6x16xbf16>, vector<2x6x16xf32> -> vector<2x6x16xf32>
    "tpu.trace_stop"() : () -> ()
    %75 = vector.extract_strided_slice %74 {offsets = [0, 0, 0], sizes = [1, 6, 16], strides = [1, 1, 1]} : vector<2x6x16xf32> to vector<1x6x16xf32>
    %76 = vector.shape_cast %75 : vector<1x6x16xf32> to vector<6x16xf32>
    %77 = vector.extract_strided_slice %74 {offsets = [1, 0, 0], sizes = [1, 6, 16], strides = [1, 1, 1]} : vector<2x6x16xf32> to vector<1x6x16xf32>
    %78 = vector.shape_cast %77 : vector<1x6x16xf32> to vector<6x16xf32>
    %79 = tpu.concatenate %76, %78 in 1 : vector<6x16xf32>, vector<6x16xf32> -> vector<6x32xf32>
    %80 = arith.truncf %79 : vector<6x32xf32> to vector<6x32xbf16>
    %c0_25 = arith.constant 0 : index
    %c0_26 = arith.constant 0 : index
    %c0_27 = arith.constant 0 : index
    %81 = vector.load %arg10[%c0_25, %c0_26, %c0_27] : memref<1x32x32xbf16, #tpu.memory_space<vmem>>, vector<1x32x32xbf16>
    %82 = vector.shape_cast %81 : vector<1x32x32xbf16> to vector<32x32xbf16>
    %cst_28 = arith.constant dense<0.000000e+00> : vector<6x32xf32>
    %83 = tpu.matmul %80, %82, %cst_28 {dimension_numbers = #tpu.dot_dimension_numbers<[1], [0], [0], [1], [0, 0, 1, 1], [], []>} : vector<6x32xbf16>, vector<32x32xbf16>, vector<6x32xf32> -> vector<6x32xf32>
    %c0_29 = arith.constant 0 : index
    %c0_30 = arith.constant 0 : index
    %c0_31 = arith.constant 0 : index
    %84 = vector.load %arg11[%c0_29, %c0_30, %c0_31] : memref<1x1x32xf32, #tpu.memory_space<vmem>>, vector<1x1x32xf32>
    %85 = vector.shape_cast %84 : vector<1x1x32xf32> to vector<1x32xf32>
    %86 = vector.broadcast %85 : vector<1x32xf32> to vector<6x32xf32>
    %87 = arith.addf %83, %86 : vector<6x32xf32>
    %88 = arith.addf %4, %87 : vector<6x32xf32>
    %c0_32 = arith.constant 0 : index
    %c0_33 = arith.constant 0 : index
    %c0_34 = arith.constant 0 : index
    %89 = vector.load %arg12[%c0_32, %c0_33, %c0_34] : memref<1x1x32xf32, #tpu.memory_space<vmem>>, vector<1x1x32xf32>
    %90 = vector.shape_cast %89 : vector<1x1x32xf32> to vector<1x32xf32>
    %c0_35 = arith.constant 0 : index
    %c0_36 = arith.constant 0 : index
    %c0_37 = arith.constant 0 : index
    %91 = vector.load %arg13[%c0_35, %c0_36, %c0_37] : memref<1x1x32xf32, #tpu.memory_space<vmem>>, vector<1x1x32xf32>
    %92 = vector.shape_cast %91 : vector<1x1x32xf32> to vector<1x32xf32>
    %cst_38 = arith.constant dense<0.000000e+00> : vector<6xf32>
    %93 = vector.multi_reduction <add>, %88, %cst_38 [1] : vector<6x32xf32> to vector<6xf32>
    %94 = vector.shape_cast %93 : vector<6xf32> to vector<6x1xf32>
    %cst_39 = arith.constant 3.200000e+01 : f32
    %95 = vector.broadcast %cst_39 : f32 to vector<6x1xf32>
    %96 = arith.divf %94, %95 : vector<6x1xf32>
    %97 = vector.broadcast %96 : vector<6x1xf32> to vector<6x32xf32>
    %98 = arith.subf %88, %97 : vector<6x32xf32>
    %99 = arith.mulf %98, %98 : vector<6x32xf32>
    %cst_40 = arith.constant dense<0.000000e+00> : vector<6xf32>
    %100 = vector.multi_reduction <add>, %99, %cst_40 [1] : vector<6x32xf32> to vector<6xf32>
    %101 = vector.shape_cast %100 : vector<6xf32> to vector<6x1xf32>
    %cst_41 = arith.constant 3.200000e+01 : f32
    %102 = vector.broadcast %cst_41 : f32 to vector<6x1xf32>
    %103 = arith.divf %101, %102 : vector<6x1xf32>
    %104 = vector.broadcast %96 : vector<6x1xf32> to vector<6x32xf32>
    %105 = arith.subf %88, %104 : vector<6x32xf32>
    %cst_42 = arith.constant 9.99999996E-13 : f32
    %106 = vector.broadcast %cst_42 : f32 to vector<6x1xf32>
    %107 = arith.addf %103, %106 : vector<6x1xf32>
    %108 = math.rsqrt %107 : vector<6x1xf32>
    %109 = vector.broadcast %108 : vector<6x1xf32> to vector<6x32xf32>
    %110 = arith.mulf %105, %109 : vector<6x32xf32>
    %111 = vector.broadcast %90 : vector<1x32xf32> to vector<6x32xf32>
    %112 = arith.mulf %110, %111 : vector<6x32xf32>
    %113 = vector.broadcast %92 : vector<1x32xf32> to vector<6x32xf32>
    %114 = arith.addf %112, %113 : vector<6x32xf32>
    %115 = arith.truncf %114 : vector<6x32xf32> to vector<6x32xbf16>
    %c0_43 = arith.constant 0 : index
    %c0_44 = arith.constant 0 : index
    %c0_45 = arith.constant 0 : index
    %116 = vector.load %arg14[%c0_43, %c0_44, %c0_45] : memref<1x32x64xbf16, #tpu.memory_space<vmem>>, vector<1x32x64xbf16>
    %117 = vector.shape_cast %116 : vector<1x32x64xbf16> to vector<32x64xbf16>
    %cst_46 = arith.constant dense<0.000000e+00> : vector<6x64xf32>
    %118 = tpu.matmul %115, %117, %cst_46 {dimension_numbers = #tpu.dot_dimension_numbers<[1], [0], [0], [1], [0, 0, 1, 1], [], []>} : vector<6x32xbf16>, vector<32x64xbf16>, vector<6x64xf32> -> vector<6x64xf32>
    %c0_47 = arith.constant 0 : index
    %c0_48 = arith.constant 0 : index
    %c0_49 = arith.constant 0 : index
    %119 = vector.load %arg15[%c0_47, %c0_48, %c0_49] : memref<1x1x64xf32, #tpu.memory_space<vmem>>, vector<1x1x64xf32>
    %120 = vector.shape_cast %119 : vector<1x1x64xf32> to vector<1x64xf32>
    %121 = vector.broadcast %120 : vector<1x64xf32> to vector<6x64xf32>
    %122 = arith.addf %118, %121 : vector<6x64xf32>
    %123 = arith.mulf %122, %122 : vector<6x64xf32>
    %124 = arith.mulf %122, %123 : vector<6x64xf32>
    %cst_50 = arith.constant 4.471500e-02 : f32
    %125 = vector.broadcast %cst_50 : f32 to vector<6x64xf32>
    %126 = arith.mulf %125, %124 : vector<6x64xf32>
    %127 = arith.addf %122, %126 : vector<6x64xf32>
    %cst_51 = arith.constant 0.797884583 : f32
    %128 = vector.broadcast %cst_51 : f32 to vector<6x64xf32>
    %129 = arith.mulf %128, %127 : vector<6x64xf32>
    %130 = math.tanh %129 : vector<6x64xf32>
    %cst_52 = arith.constant 1.000000e+00 : f32
    %131 = vector.broadcast %cst_52 : f32 to vector<6x64xf32>
    %132 = arith.addf %131, %130 : vector<6x64xf32>
    %cst_53 = arith.constant 5.000000e-01 : f32
    %133 = vector.broadcast %cst_53 : f32 to vector<6x64xf32>
    %134 = arith.mulf %133, %132 : vector<6x64xf32>
    %135 = arith.mulf %122, %134 : vector<6x64xf32>
    %136 = arith.truncf %135 : vector<6x64xf32> to vector<6x64xbf16>
    %c0_54 = arith.constant 0 : index
    %c0_55 = arith.constant 0 : index
    %c0_56 = arith.constant 0 : index
    %137 = vector.load %arg16[%c0_54, %c0_55, %c0_56] : memref<1x64x32xbf16, #tpu.memory_space<vmem>>, vector<1x64x32xbf16>
    %138 = vector.shape_cast %137 : vector<1x64x32xbf16> to vector<64x32xbf16>
    %cst_57 = arith.constant dense<0.000000e+00> : vector<6x32xf32>
    %139 = tpu.matmul %136, %138, %cst_57 {dimension_numbers = #tpu.dot_dimension_numbers<[1], [0], [0], [1], [0, 0, 1, 1], [], []>} : vector<6x64xbf16>, vector<64x32xbf16>, vector<6x32xf32> -> vector<6x32xf32>
    %c0_58 = arith.constant 0 : index
    %c0_59 = arith.constant 0 : index
    %c0_60 = arith.constant 0 : index
    %140 = vector.load %arg17[%c0_58, %c0_59, %c0_60] : memref<1x1x32xf32, #tpu.memory_space<vmem>>, vector<1x1x32xf32>
    %141 = vector.shape_cast %140 : vector<1x1x32xf32> to vector<1x32xf32>
    %142 = vector.broadcast %141 : vector<1x32xf32> to vector<6x32xf32>
    %143 = arith.addf %139, %142 : vector<6x32xf32>
    %144 = arith.addf %88, %143 : vector<6x32xf32>
    %c0_61 = arith.constant 0 : index
    %c0_62 = arith.constant 0 : index
    %c0_63 = arith.constant 0 : index
    %145 = vector.load %arg18[%c0_61, %c0_62, %c0_63] : memref<1x6x32xf32, #tpu.memory_space<vmem>>, vector<1x6x32xf32>
    %146 = vector.shape_cast %145 : vector<1x6x32xf32> to vector<6x32xf32>
    %147 = vector.shape_cast %144 : vector<6x32xf32> to vector<1x6x32xf32>
    tpu.vector_store %arg18[%c0_61, %c0_62, %c0_63], %147 {strides = array<i32>} : memref<1x6x32xf32, #tpu.memory_space<vmem>>, vector<1x6x32xf32>,
    return
  }
  func.func @transform_0(%arg0: i32, %arg1: i32) -> (i32, i32, i32) {
    %c0_i32 = arith.constant 0 : i32
    %c0_i32_0 = arith.constant 0 : i32
    %c0_i32_1 = arith.constant 0 : i32
    %c0_i32_2 = arith.constant 0 : i32
    return %c0_i32, %c0_i32_0, %c0_i32_1 : i32, i32, i32
  }
  func.func @transform_1(%arg0: i32, %arg1: i32) -> (i32, i32, i32) {
    %c0_i32 = arith.constant 0 : i32
    %c0_i32_0 = arith.constant 0 : i32
    %c0_i32_1 = arith.constant 0 : i32
    return %arg0, %c0_i32, %c0_i32_0 : i32, i32, i32
  }
  func.func @transform_2(%arg0: i32, %arg1: i32) -> (i32, i32) {
    %c0_i32 = arith.constant 0 : i32
    %c0_i32_0 = arith.constant 0 : i32
    %c0_i32_1 = arith.constant 0 : i32
    return %c0_i32, %c0_i32_0 : i32, i32
  }
  func.func @transform_3(%arg0: i32, %arg1: i32) -> (i32, i32) {
    %c0_i32 = arith.constant 0 : i32
    %c0_i32_0 = arith.constant 0 : i32
    %c0_i32_1 = arith.constant 0 : i32
    return %c0_i32, %c0_i32_0 : i32, i32
  }
  func.func @transform_4(%arg0: i32, %arg1: i32) -> (i32, i32, i32) {
    %c0_i32 = arith.constant 0 : i32
    %c0_i32_0 = arith.constant 0 : i32
    %c0_i32_1 = arith.constant 0 : i32
    return %arg1, %c0_i32, %c0_i32_0 : i32, i32, i32
  }
  func.func @transform_5(%arg0: i32, %arg1: i32) -> (i32, i32, i32) {
    %c0_i32 = arith.constant 0 : i32
    %c0_i32_0 = arith.constant 0 : i32
    %c0_i32_1 = arith.constant 0 : i32
    return %arg1, %c0_i32, %c0_i32_0 : i32, i32, i32
  }
  func.func @transform_6(%arg0: i32, %arg1: i32) -> (i32, i32, i32) {
    %c0_i32 = arith.constant 0 : i32
    %c0_i32_0 = arith.constant 0 : i32
    %c0_i32_1 = arith.constant 0 : i32
    return %arg1, %c0_i32, %c0_i32_0 : i32, i32, i32
  }
  func.func @transform_7(%arg0: i32, %arg1: i32) -> (i32, i32, i32) {
    %c0_i32 = arith.constant 0 : i32
    %c0_i32_0 = arith.constant 0 : i32
    %c0_i32_1 = arith.constant 0 : i32
    return %arg1, %c0_i32, %c0_i32_0 : i32, i32, i32
  }
  func.func @transform_8(%arg0: i32, %arg1: i32) -> (i32, i32, i32) {
    %c0_i32 = arith.constant 0 : i32
    %c0_i32_0 = arith.constant 0 : i32
    %c0_i32_1 = arith.constant 0 : i32
    return %arg1, %c0_i32, %c0_i32_0 : i32, i32, i32
  }
  func.func @transform_9(%arg0: i32, %arg1: i32) -> (i32, i32, i32) {
    %c0_i32 = arith.constant 0 : i32
    %c0_i32_0 = arith.constant 0 : i32
    %c0_i32_1 = arith.constant 0 : i32
    return %arg1, %c0_i32, %c0_i32_0 : i32, i32, i32
  }
  func.func @transform_10(%arg0: i32, %arg1: i32) -> (i32, i32, i32) {
    %c0_i32 = arith.constant 0 : i32
    %c0_i32_0 = arith.constant 0 : i32
    %c0_i32_1 = arith.constant 0 : i32
    return %arg1, %c0_i32, %c0_i32_0 : i32, i32, i32
  }
  func.func @transform_11(%arg0: i32, %arg1: i32) -> (i32, i32, i32) {
    %c0_i32 = arith.constant 0 : i32
    %c0_i32_0 = arith.constant 0 : i32
    %c0_i32_1 = arith.constant 0 : i32
    return %arg1, %c0_i32, %c0_i32_0 : i32, i32, i32
  }
  func.func @transform_12(%arg0: i32, %arg1: i32) -> (i32, i32, i32) {
    %c0_i32 = arith.constant 0 : i32
    %c0_i32_0 = arith.constant 0 : i32
    %c0_i32_1 = arith.constant 0 : i32
    return %arg1, %c0_i32, %c0_i32_0 : i32, i32, i32
  }
  func.func @transform_13(%arg0: i32, %arg1: i32) -> (i32, i32, i32) {
    %c0_i32 = arith.constant 0 : i32
    %c0_i32_0 = arith.constant 0 : i32
    %c0_i32_1 = arith.constant 0 : i32
    return %arg1, %c0_i32, %c0_i32_0 : i32, i32, i32
  }
  func.func @transform_14(%arg0: i32, %arg1: i32) -> (i32, i32, i32) {
    %c0_i32 = arith.constant 0 : i32
    %c0_i32_0 = arith.constant 0 : i32
    %c0_i32_1 = arith.constant 0 : i32
    return %arg1, %c0_i32, %c0_i32_0 : i32, i32, i32
  }
  func.func @transform_15(%arg0: i32, %arg1: i32) -> (i32, i32, i32) {
    %c0_i32 = arith.constant 0 : i32
    %c0_i32_0 = arith.constant 0 : i32
    %c0_i32_1 = arith.constant 0 : i32
    return %arg1, %c0_i32, %c0_i32_0 : i32, i32, i32
  }
  func.func @transform_16(%arg0: i32, %arg1: i32) -> (i32, i32, i32) {
    %c0_i32 = arith.constant 0 : i32
    %c0_i32_0 = arith.constant 0 : i32
    %c0_i32_1 = arith.constant 0 : i32
    return %arg0, %c0_i32, %c0_i32_0 : i32, i32, i32
  }
}

</mosaic_0001>

<llo_original>
// kernel: tpu_custom_call.1
$region0: #{tpu_custom_call.1}
  #allocation0 [shape = 'u32[]', space=smem, size = 0x4, offset = 0x4, fixed_abs, tag = 'smem constant byte address 0x4 - core index']
  #allocation1 [shape = 'u32[72,128]{1,0:T(1,128)}', space=vmem, size = 0x9000, scoped, tag = 'internal scratch']
  %s0 = inlined_call_operand.vmem [shape: f32[1,6,32], index: 0, kind: input, shape index: {}]
  %s1 = inlined_call_operand.vmem [shape: bf16[2,4,64], index: 1, kind: input, shape index: {}]
  %s2 = inlined_call_operand.vmem [shape: bf16[64,32], index: 2, kind: input, shape index: {}]
  %s3 = inlined_call_operand.vmem [shape: f32[1,32], index: 3, kind: input, shape index: {}]
  %s4 = inlined_call_operand.vmem [shape: f32[2,1,32], index: 4, kind: input, shape index: {}]
  %s5 = inlined_call_operand.vmem [shape: f32[2,1,32], index: 5, kind: input, shape index: {}]
  %s6 = inlined_call_operand.vmem [shape: bf16[2,32,96], index: 6, kind: input, shape index: {}]
  %s7 = inlined_call_operand.vmem [shape: f32[2,1,96], index: 7, kind: input, shape index: {}]
  %s8 = inlined_call_operand.vmem [shape: bf16[2,32,32], index: 8, kind: input, shape index: {}]
  %s9 = inlined_call_operand.vmem [shape: f32[2,1,32], index: 9, kind: input, shape index: {}]
  %s10 = inlined_call_operand.vmem [shape: f32[2,1,32], index: 10, kind: input, shape index: {}]
  %s11 = inlined_call_operand.vmem [shape: f32[2,1,32], index: 11, kind: input, shape index: {}]
  %s12 = inlined_call_operand.vmem [shape: bf16[2,32,64], index: 12, kind: input, shape index: {}]
  %s13 = inlined_call_operand.vmem [shape: f32[2,1,64], index: 13, kind: input, shape index: {}]
  %s14 = inlined_call_operand.vmem [shape: bf16[2,64,32], index: 14, kind: input, shape index: {}]
  %s15 = inlined_call_operand.vmem [shape: f32[2,1,32], index: 15, kind: input, shape index: {}]
  %s16 = inlined_call_operand.vmem [shape: f32[2,6,32], index: 16, kind: output, shape index: {}]
  %s17 = sld [smem:[#allocation0]]
  $region101: #{tpu_custom_call.1} parent=0
    _
  %s19 = ssub.s32 1, %s17
  %s20 = scalar_select 0, %s19, %s17
  loop: start=0, step=1, limit=6
  $region2: #{tpu_custom_call.1} parent=0 // loop_pre_header
    _
  $region3: #{tpu_custom_call.1} parent=0 // loop_header
    %s22 = sphi 0, %s26
    %p23 = scmp.ge.s32.totalorder %s22, 6
    %s29 = sphi 0, %s41
    %s30 = sphi 0, %s37
    %s31 = sphi 0, %s29
    %s32 = sphi 0, %s30
    %s33 = sphi 0, %s31
    %s34 = sphi 0, %s32
    %s42 = sphi 0, %s42
    %s44 = sphi 0, %s42
    %s45 = sphi 0, %s44
    %s59 = sphi 0, %s45
    %s65 = sphi 0, %s67
    %s68 = sphi 0, %s65
    %s69 = sphi 0, %s68
    %s85 = sphi 0, %s69
    %s89 = sphi 0, %s89
    %s91 = sphi 0, %s89
    %s92 = sphi 0, %s91
    %s106 = sphi 0, %s92
    %s110 = sphi 0, %s110
    %s112 = sphi 0, %s110
    %s113 = sphi 0, %s112
    %s127 = sphi 0, %s113
    %s133 = sphi 0, %s135
    %s136 = sphi 0, %s133
    %s137 = sphi 0, %s136
    %s153 = sphi 0, %s137
    %s159 = sphi 0, %s161
    %s162 = sphi 0, %s159
    %s163 = sphi 0, %s162
    %s179 = sphi 0, %s163
    %s185 = sphi 0, %s187
    %s188 = sphi 0, %s185
    %s189 = sphi 0, %s188
    %s205 = sphi 0, %s189
    %s211 = sphi 0, %s213
    %s214 = sphi 0, %s211
    %s215 = sphi 0, %s214
    %s231 = sphi 0, %s215
    %s237 = sphi 0, %s239
    %s240 = sphi 0, %s237
    %s241 = sphi 0, %s240
    %s257 = sphi 0, %s241
    %s263 = sphi 0, %s265
    %s266 = sphi 0, %s263
    %s267 = sphi 0, %s266
    %s283 = sphi 0, %s267
    %s289 = sphi 0, %s291
    %s292 = sphi 0, %s289
    %s293 = sphi 0, %s292
    %s309 = sphi 0, %s293
    %s315 = sphi 0, %s317
    %s318 = sphi 0, %s315
    %s319 = sphi 0, %s318
    %s335 = sphi 0, %s319
    %s341 = sphi 0, %s343
    %s344 = sphi 0, %s341
    %s345 = sphi 0, %s344
    %s361 = sphi 0, %s345
    %s367 = sphi 0, %s369
    %s370 = sphi 0, %s367
    %s371 = sphi 0, %s370
    %s387 = sphi 0, %s371
    %s393 = sphi 0, %s395
    %s396 = sphi 0, %s393
    %s397 = sphi 0, %s396
    %s413 = sphi 0, %s397
    %s419 = sphi 0, %s421
    %s422 = sphi 0, %s419
    %s423 = sphi 0, %s422
    %s439 = sphi 0, %s423
    %s445 = sphi 0, %s447
    %s448 = sphi 0, %s445
    %s449 = sphi 0, %s448
    %s465 = sphi 0, %s449
  $region4: #{tpu_custom_call.1} parent=0 // loop_header_branch
    %25 = sbr.rel (%p23) target = $region8
  $region5: #{tpu_custom_call.1} parent=0 // loop_body
    %s27 = ssub.s32 %s22, 1
    %s28 = ssub.s32 %s22, 2
    %s35 = sadd.s32 1, %s30
    %p36 = scmp.ge.s32.totalorder %s35, 2
    %s37 = scalar_select %p36, 0, %s35
    %s38 = sadd.s32 1, %s29
    %s39 = scalar_select %p36, %s38, %s29
    %p40 = scmp.ge.s32.totalorder %s39, 2
    %s41 = scalar_select %p40, 0, %s39
    %s43 = sadd.s32 %s42, 1
    %p46 = scmp.eq.s32.totalorder %s22, 3
    %p47 = scmp.ne.s32.totalorder %s42, %s44
    %p48 = scmp.eq.s32.totalorder %s22, 0
    %p49 = por %p47, %p48
    %p50 = scmp.ne.s32.totalorder %s42, %s44
    %p51 = scmp.eq.s32.totalorder %s27, 3
    %p52 = por %p50, %p51
    %p53 = scmp.ne.s32.totalorder %s44, %s45
    %p54 = scmp.eq.s32.totalorder %s27, 0
    %p55 = por %p53, %p54
    %p56 = scmp.ne.s32.totalorder %s44, %s45
    %p57 = scmp.eq.s32.totalorder %s28, 3
    %p58 = por %p56, %p57
    %p60 = scmp.ne.s32.totalorder %s45, %s59
    %p61 = scmp.eq.s32.totalorder %s28, 0
    %p62 = por %p60, %p61
    %s63 = ssub.s32 %s29, %s41
    %p64 = scmp.eq.s32.totalorder %s63, 0
    %s66 = sadd.s32 %s65, 1
    %s67 = scalar_select %p64, %s65, %s66
    %p70 = pneg %p64
    %p71 = scmp.eq.s32.totalorder %s22, 3
    %p72 = por %p70, %p71
    %p73 = scmp.ne.s32.totalorder %s65, %s68
    %p74 = scmp.eq.s32.totalorder %s22, 0
    %p75 = por %p73, %p74
    %p76 = scmp.ne.s32.totalorder %s65, %s68
    %p77 = scmp.eq.s32.totalorder %s27, 3
    %p78 = por %p76, %p77
    %p79 = scmp.ne.s32.totalorder %s68, %s69
    %p80 = scmp.eq.s32.totalorder %s27, 0
    %p81 = por %p79, %p80
    %p82 = scmp.ne.s32.totalorder %s68, %s69
    %p83 = scmp.eq.s32.totalorder %s28, 3
    %p84 = por %p82, %p83
    %p86 = scmp.ne.s32.totalorder %s69, %s85
    %p87 = scmp.eq.s32.totalorder %s28, 0
    %p88 = por %p86, %p87
    %s90 = sadd.s32 %s89, 1
    %p93 = scmp.eq.s32.totalorder %s22, 3
    %p94 = scmp.ne.s32.totalorder %s89, %s91
    %p95 = scmp.eq.s32.totalorder %s22, 0
    %p96 = por %p94, %p95
    %p97 = scmp.ne.s32.totalorder %s89, %s91
    %p98 = scmp.eq.s32.totalorder %s27, 3
    %p99 = por %p97, %p98
    %p100 = scmp.ne.s32.totalorder %s91, %s92
    %p101 = scmp.eq.s32.totalorder %s27, 0
    %p102 = por %p100, %p101
    %p103 = scmp.ne.s32.totalorder %s91, %s92
    %p104 = scmp.eq.s32.totalorder %s28, 3
    %p105 = por %p103, %p104
    %p107 = scmp.ne.s32.totalorder %s92, %s106
    %p108 = scmp.eq.s32.totalorder %s28, 0
    %p109 = por %p107, %p108
    %s111 = sadd.s32 %s110, 1
    %p114 = scmp.eq.s32.totalorder %s22, 3
    %p115 = scmp.ne.s32.totalorder %s110, %s112
    %p116 = scmp.eq.s32.totalorder %s22, 0
    %p117 = por %p115, %p116
    %p118 = scmp.ne.s32.totalorder %s110, %s112
    %p119 = scmp.eq.s32.totalorder %s27, 3
    %p120 = por %p118, %p119
    %p121 = scmp.ne.s32.totalorder %s112, %s113
    %p122 = scmp.eq.s32.totalorder %s27, 0
    %p123 = por %p121, %p122
    %p124 = scmp.ne.s32.totalorder %s112, %s113
    %p125 = scmp.eq.s32.totalorder %s28, 3
    %p126 = por %p124, %p125
    %p128 = scmp.ne.s32.totalorder %s113, %s127
    %p129 = scmp.eq.s32.totalorder %s28, 0
    %p130 = por %p128, %p129
    %s131 = ssub.s32 %s30, %s37
    %p132 = scmp.eq.s32.totalorder %s131, 0
    %s134 = sadd.s32 %s133, 1
    %s135 = scalar_select %p132, %s133, %s134
    %p138 = pneg %p132
    %p139 = scmp.eq.s32.totalorder %s22, 3
    %p140 = por %p138, %p139
    %p141 = scmp.ne.s32.totalorder %s133, %s136
    %p142 = scmp.eq.s32.totalorder %s22, 0
    %p143 = por %p141, %p142
    %p144 = scmp.ne.s32.totalorder %s133, %s136
    %p145 = scmp.eq.s32.totalorder %s27, 3
    %p146 = por %p144, %p145
    %p147 = scmp.ne.s32.totalorder %s136, %s137
    %p148 = scmp.eq.s32.totalorder %s27, 0
    %p149 = por %p147, %p148
    %p150 = scmp.ne.s32.totalorder %s136, %s137
    %p151 = scmp.eq.s32.totalorder %s28, 3
    %p152 = por %p150, %p151
    %p154 = scmp.ne.s32.totalorder %s137, %s153
    %p155 = scmp.eq.s32.totalorder %s28, 0
    %p156 = por %p154, %p155
    %s157 = ssub.s32 %s30, %s37
    %p158 = scmp.eq.s32.totalorder %s157, 0
    %s160 = sadd.s32 %s159, 1
    %s161 = scalar_select %p158, %s159, %s160
    %p164 = pneg %p158
    %p165 = scmp.eq.s32.totalorder %s22, 3
    %p166 = por %p164, %p165
    %p167 = scmp.ne.s32.totalorder %s159, %s162
    %p168 = scmp.eq.s32.totalorder %s22, 0
    %p169 = por %p167, %p168
    %p170 = scmp.ne.s32.totalorder %s159, %s162
    %p171 = scmp.eq.s32.totalorder %s27, 3
    %p172 = por %p170, %p171
    %p173 = scmp.ne.s32.totalorder %s162, %s163
    %p174 = scmp.eq.s32.totalorder %s27, 0
    %p175 = por %p173, %p174
    %p176 = scmp.ne.s32.totalorder %s162, %s163
    %p177 = scmp.eq.s32.totalorder %s28, 3
    %p178 = por %p176, %p177
    %p180 = scmp.ne.s32.totalorder %s163, %s179
    %p181 = scmp.eq.s32.totalorder %s28, 0
    %p182 = por %p180, %p181
    %s183 = ssub.s32 %s30, %s37
    %p184 = scmp.eq.s32.totalorder %s183, 0
    %s186 = sadd.s32 %s185, 1
    %s187 = scalar_select %p184, %s185, %s186
    %p190 = pneg %p184
    %p191 = scmp.eq.s32.totalorder %s22, 3
    %p192 = por %p190, %p191
    %p193 = scmp.ne.s32.totalorder %s185, %s188
    %p194 = scmp.eq.s32.totalorder %s22, 0
    %p195 = por %p193, %p194
    %p196 = scmp.ne.s32.totalorder %s185, %s188
    %p197 = scmp.eq.s32.totalorder %s27, 3
    %p198 = por %p196, %p197
    %p199 = scmp.ne.s32.totalorder %s188, %s189
    %p200 = scmp.eq.s32.totalorder %s27, 0
    %p201 = por %p199, %p200
    %p202 = scmp.ne.s32.totalorder %s188, %s189
    %p203 = scmp.eq.s32.totalorder %s28, 3
    %p204 = por %p202, %p203
    %p206 = scmp.ne.s32.totalorder %s189, %s205
    %p207 = scmp.eq.s32.totalorder %s28, 0
    %p208 = por %p206, %p207
    %s209 = ssub.s32 %s30, %s37
    %p210 = scmp.eq.s32.totalorder %s209, 0
    %s212 = sadd.s32 %s211, 1
    %s213 = scalar_select %p210, %s211, %s212
    %p216 = pneg %p210
    %p217 = scmp.eq.s32.totalorder %s22, 3
    %p218 = por %p216, %p217
    %p219 = scmp.ne.s32.totalorder %s211, %s214
    %p220 = scmp.eq.s32.totalorder %s22, 0
    %p221 = por %p219, %p220
    %p222 = scmp.ne.s32.totalorder %s211, %s214
    %p223 = scmp.eq.s32.totalorder %s27, 3
    %p224 = por %p222, %p223
    %p225 = scmp.ne.s32.totalorder %s214, %s215
    %p226 = scmp.eq.s32.totalorder %s27, 0
    %p227 = por %p225, %p226
    %p228 = scmp.ne.s32.totalorder %s214, %s215
    %p229 = scmp.eq.s32.totalorder %s28, 3
    %p230 = por %p228, %p229
    %p232 = scmp.ne.s32.totalorder %s215, %s231
    %p233 = scmp.eq.s32.totalorder %s28, 0
    %p234 = por %p232, %p233
    %s235 = ssub.s32 %s30, %s37
    %p236 = scmp.eq.s32.totalorder %s235, 0
    %s238 = sadd.s32 %s237, 1
    %s239 = scalar_select %p236, %s237, %s238
    %p242 = pneg %p236
    %p243 = scmp.eq.s32.totalorder %s22, 3
    %p244 = por %p242, %p243
    %p245 = scmp.ne.s32.totalorder %s237, %s240
    %p246 = scmp.eq.s32.totalorder %s22, 0
    %p247 = por %p245, %p246
    %p248 = scmp.ne.s32.totalorder %s237, %s240
    %p249 = scmp.eq.s32.totalorder %s27, 3
    %p250 = por %p248, %p249
    %p251 = scmp.ne.s32.totalorder %s240, %s241
    %p252 = scmp.eq.s32.totalorder %s27, 0
    %p253 = por %p251, %p252
    %p254 = scmp.ne.s32.totalorder %s240, %s241
    %p255 = scmp.eq.s32.totalorder %s28, 3
    %p256 = por %p254, %p255
    %p258 = scmp.ne.s32.totalorder %s241, %s257
    %p259 = scmp.eq.s32.totalorder %s28, 0
    %p260 = por %p258, %p259
    %s261 = ssub.s32 %s30, %s37
    %p262 = scmp.eq.s32.totalorder %s261, 0
    %s264 = sadd.s32 %s263, 1
    %s265 = scalar_select %p262, %s263, %s264
    %p268 = pneg %p262
    %p269 = scmp.eq.s32.totalorder %s22, 3
    %p270 = por %p268, %p269
    %p271 = scmp.ne.s32.totalorder %s263, %s266
    %p272 = scmp.eq.s32.totalorder %s22, 0
    %p273 = por %p271, %p272
    %p274 = scmp.ne.s32.totalorder %s263, %s266
    %p275 = scmp.eq.s32.totalorder %s27, 3
    %p276 = por %p274, %p275
    %p277 = scmp.ne.s32.totalorder %s266, %s267
    %p278 = scmp.eq.s32.totalorder %s27, 0
    %p279 = por %p277, %p278
    %p280 = scmp.ne.s32.totalorder %s266, %s267
    %p281 = scmp.eq.s32.totalorder %s28, 3
    %p282 = por %p280, %p281
    %p284 = scmp.ne.s32.totalorder %s267, %s283
    %p285 = scmp.eq.s32.totalorder %s28, 0
    %p286 = por %p284, %p285
    %s287 = ssub.s32 %s30, %s37
    %p288 = scmp.eq.s32.totalorder %s287, 0
    %s290 = sadd.s32 %s289, 1
    %s291 = scalar_select %p288, %s289, %s290
    %p294 = pneg %p288
    %p295 = scmp.eq.s32.totalorder %s22, 3
    %p296 = por %p294, %p295
    %p297 = scmp.ne.s32.totalorder %s289, %s292
    %p298 = scmp.eq.s32.totalorder %s22, 0
    %p299 = por %p297, %p298
    %p300 = scmp.ne.s32.totalorder %s289, %s292
    %p301 = scmp.eq.s32.totalorder %s27, 3
    %p302 = por %p300, %p301
    %p303 = scmp.ne.s32.totalorder %s292, %s293
    %p304 = scmp.eq.s32.totalorder %s27, 0
    %p305 = por %p303, %p304
    %p306 = scmp.ne.s32.totalorder %s292, %s293
    %p307 = scmp.eq.s32.totalorder %s28, 3
    %p308 = por %p306, %p307
    %p310 = scmp.ne.s32.totalorder %s293, %s309
    %p311 = scmp.eq.s32.totalorder %s28, 0
    %p312 = por %p310, %p311
    %s313 = ssub.s32 %s30, %s37
    %p314 = scmp.eq.s32.totalorder %s313, 0
    %s316 = sadd.s32 %s315, 1
    %s317 = scalar_select %p314, %s315, %s316
    %p320 = pneg %p314
    %p321 = scmp.eq.s32.totalorder %s22, 3
    %p322 = por %p320, %p321
    %p323 = scmp.ne.s32.totalorder %s315, %s318
    %p324 = scmp.eq.s32.totalorder %s22, 0
    %p325 = por %p323, %p324
    %p326 = scmp.ne.s32.totalorder %s315, %s318
    %p327 = scmp.eq.s32.totalorder %s27, 3
    %p328 = por %p326, %p327
    %p329 = scmp.ne.s32.totalorder %s318, %s319
    %p330 = scmp.eq.s32.totalorder %s27, 0
    %p331 = por %p329, %p330
    %p332 = scmp.ne.s32.totalorder %s318, %s319
    %p333 = scmp.eq.s32.totalorder %s28, 3
    %p334 = por %p332, %p333
    %p336 = scmp.ne.s32.totalorder %s319, %s335
    %p337 = scmp.eq.s32.totalorder %s28, 0
    %p338 = por %p336, %p337
    %s339 = ssub.s32 %s30, %s37
    %p340 = scmp.eq.s32.totalorder %s339, 0
    %s342 = sadd.s32 %s341, 1
    %s343 = scalar_select %p340, %s341, %s342
    %p346 = pneg %p340
    %p347 = scmp.eq.s32.totalorder %s22, 3
    %p348 = por %p346, %p347
    %p349 = scmp.ne.s32.totalorder %s341, %s344
    %p350 = scmp.eq.s32.totalorder %s22, 0
    %p351 = por %p349, %p350
    %p352 = scmp.ne.s32.totalorder %s341, %s344
    %p353 = scmp.eq.s32.totalorder %s27, 3
    %p354 = por %p352, %p353
    %p355 = scmp.ne.s32.totalorder %s344, %s345
    %p356 = scmp.eq.s32.totalorder %s27, 0
    %p357 = por %p355, %p356
    %p358 = scmp.ne.s32.totalorder %s344, %s345
    %p359 = scmp.eq.s32.totalorder %s28, 3
    %p360 = por %p358, %p359
    %p362 = scmp.ne.s32.totalorder %s345, %s361
    %p363 = scmp.eq.s32.totalorder %s28, 0
    %p364 = por %p362, %p363
    %s365 = ssub.s32 %s30, %s37
    %p366 = scmp.eq.s32.totalorder %s365, 0
    %s368 = sadd.s32 %s367, 1
    %s369 = scalar_select %p366, %s367, %s368
    %p372 = pneg %p366
    %p373 = scmp.eq.s32.totalorder %s22, 3
    %p374 = por %p372, %p373
    %p375 = scmp.ne.s32.totalorder %s367, %s370
    %p376 = scmp.eq.s32.totalorder %s22, 0
    %p377 = por %p375, %p376
    %p378 = scmp.ne.s32.totalorder %s367, %s370
    %p379 = scmp.eq.s32.totalorder %s27, 3
    %p380 = por %p378, %p379
    %p381 = scmp.ne.s32.totalorder %s370, %s371
    %p382 = scmp.eq.s32.totalorder %s27, 0
    %p383 = por %p381, %p382
    %p384 = scmp.ne.s32.totalorder %s370, %s371
    %p385 = scmp.eq.s32.totalorder %s28, 3
    %p386 = por %p384, %p385
    %p388 = scmp.ne.s32.totalorder %s371, %s387
    %p389 = scmp.eq.s32.totalorder %s28, 0
    %p390 = por %p388, %p389
    %s391 = ssub.s32 %s30, %s37
    %p392 = scmp.eq.s32.totalorder %s391, 0
    %s394 = sadd.s32 %s393, 1
    %s395 = scalar_select %p392, %s393, %s394
    %p398 = pneg %p392
    %p399 = scmp.eq.s32.totalorder %s22, 3
    %p400 = por %p398, %p399
    %p401 = scmp.ne.s32.totalorder %s393, %s396
    %p402 = scmp.eq.s32.totalorder %s22, 0
    %p403 = por %p401, %p402
    %p404 = scmp.ne.s32.totalorder %s393, %s396
    %p405 = scmp.eq.s32.totalorder %s27, 3
    %p406 = por %p404, %p405
    %p407 = scmp.ne.s32.totalorder %s396, %s397
    %p408 = scmp.eq.s32.totalorder %s27, 0
    %p409 = por %p407, %p408
    %p410 = scmp.ne.s32.totalorder %s396, %s397
    %p411 = scmp.eq.s32.totalorder %s28, 3
    %p412 = por %p410, %p411
    %p414 = scmp.ne.s32.totalorder %s397, %s413
    %p415 = scmp.eq.s32.totalorder %s28, 0
    %p416 = por %p414, %p415
    %s417 = ssub.s32 %s30, %s37
    %p418 = scmp.eq.s32.totalorder %s417, 0
    %s420 = sadd.s32 %s419, 1
    %s421 = scalar_select %p418, %s419, %s420
    %p424 = pneg %p418
    %p425 = scmp.eq.s32.totalorder %s22, 3
    %p426 = por %p424, %p425
    %p427 = scmp.ne.s32.totalorder %s419, %s422
    %p428 = scmp.eq.s32.totalorder %s22, 0
    %p429 = por %p427, %p428
    %p430 = scmp.ne.s32.totalorder %s419, %s422
    %p431 = scmp.eq.s32.totalorder %s27, 3
    %p432 = por %p430, %p431
    %p433 = scmp.ne.s32.totalorder %s422, %s423
    %p434 = scmp.eq.s32.totalorder %s27, 0
    %p435 = por %p433, %p434
    %p436 = scmp.ne.s32.totalorder %s422, %s423
    %p437 = scmp.eq.s32.totalorder %s28, 3
    %p438 = por %p436, %p437
    %p440 = scmp.ne.s32.totalorder %s423, %s439
    %p441 = scmp.eq.s32.totalorder %s28, 0
    %p442 = por %p440, %p441
    %s443 = ssub.s32 %s29, %s41
    %p444 = scmp.eq.s32.totalorder %s443, 0
    %s446 = sadd.s32 %s445, 1
    %s447 = scalar_select %p444, %s445, %s446
    %p450 = pneg %p444
    %p451 = scmp.eq.s32.totalorder %s22, 3
    %p452 = por %p450, %p451
    %p453 = scmp.ne.s32.totalorder %s445, %s448
    %p454 = scmp.eq.s32.totalorder %s22, 0
    %p455 = por %p453, %p454
    %p456 = scmp.ne.s32.totalorder %s445, %s448
    %p457 = scmp.eq.s32.totalorder %s27, 3
    %p458 = por %p456, %p457
    %p459 = scmp.ne.s32.totalorder %s448, %s449
    %p460 = scmp.eq.s32.totalorder %s27, 0
    %p461 = por %p459, %p460
    %p462 = scmp.ne.s32.totalorder %s448, %s449
    %p463 = scmp.eq.s32.totalorder %s28, 3
    %p464 = por %p462, %p463
    %p466 = scmp.ne.s32.totalorder %s449, %s465
    %p467 = scmp.eq.s32.totalorder %s28, 0
    %p468 = por %p466, %p467
    %p469 = scmp.le.s32.totalorder 1, %s22
    %p470 = scmp.lt.s32.totalorder %s22, 5
    %p471 = pnand %p469, %p470
    %p472 = pneg %p471
    // Predicated region
    $region9: #{tpu_custom_call.1} parent=5 // pred_check
      _
    $region10: #{tpu_custom_call.1} parent=5 // pred_check_branch
      %474 = sbr.rel (%p471) target = $region12
    $region11: #{tpu_custom_call.1} parent=5 // pred_region
      %s475 = ssub.s32 %s22, 1
      // Predicated region
      $region13: #{tpu_custom_call.1} parent=11 // pred_check
        %p476 = pneg %p55
      $region14: #{tpu_custom_call.1} parent=11 // pred_check_branch
        %478 = sbr.rel (%p476) target = $region16
      $region15: #{tpu_custom_call.1} parent=11 // pred_region
        _
      $region16: #{tpu_custom_call.1} parent=11 // pred_fallthru
        _
      // Predicated region
      $region17: #{tpu_custom_call.1} parent=11 // pred_check
        %p479 = pneg %p102
      $region18: #{tpu_custom_call.1} parent=11 // pred_check_branch
        %481 = sbr.rel (%p479) target = $region20
      $region19: #{tpu_custom_call.1} parent=11 // pred_region
        _
      $region20: #{tpu_custom_call.1} parent=11 // pred_fallthru
        _
      // Predicated region
      $region21: #{tpu_custom_call.1} parent=11 // pred_check
        %p482 = pneg %p123
      $region22: #{tpu_custom_call.1} parent=11 // pred_check_branch
        %484 = sbr.rel (%p482) target = $region24
      $region23: #{tpu_custom_call.1} parent=11 // pred_region
        _
      $region24: #{tpu_custom_call.1} parent=11 // pred_fallthru
        _
    $region12: #{tpu_custom_call.1} parent=5 // pred_fallthru
      _
    %p485 = scmp.lt.s32.totalorder %s22, 4
    // Predicated region
    $region25: #{tpu_custom_call.1} parent=5 // pred_check
      %p486 = pneg %p485
    $region26: #{tpu_custom_call.1} parent=5 // pred_check_branch
      %488 = sbr.rel (%p486) target = $region28
    $region27: #{tpu_custom_call.1} parent=5 // pred_region
      // Predicated region
      $region29: #{tpu_custom_call.1} parent=27 // pred_check
        %p489 = pneg %p75
      $region30: #{tpu_custom_call.1} parent=27 // pred_check_branch
        %491 = sbr.rel (%p489) target = $region32
      $region31: #{tpu_custom_call.1} parent=27 // pred_region
        %p492 = scmp.lt.s32.totalorder %s29, 1
        %s493 = scalar_select %p492, %s29, 1
        %s494 = smul.addr %s493, 2
        %s495 = scalar_lea.vmem %s1, %s494
      $region32: #{tpu_custom_call.1} parent=27 // pred_fallthru
        _
      // Predicated region
      $region33: #{tpu_custom_call.1} parent=27 // pred_check
        %p496 = pneg %p143
      $region34: #{tpu_custom_call.1} parent=27 // pred_check_branch
        %498 = sbr.rel (%p496) target = $region36
      $region35: #{tpu_custom_call.1} parent=27 // pred_region
        %p499 = scmp.lt.s32.totalorder %s30, 1
        %s500 = scalar_select %p499, %s30, 1
        %s501 = scalar_lea.vmem %s4, %s500
      $region36: #{tpu_custom_call.1} parent=27 // pred_fallthru
        _
      // Predicated region
      $region37: #{tpu_custom_call.1} parent=27 // pred_check
        %p502 = pneg %p169
      $region38: #{tpu_custom_call.1} parent=27 // pred_check_branch
        %504 = sbr.rel (%p502) target = $region40
      $region39: #{tpu_custom_call.1} parent=27 // pred_region
        %p505 = scmp.lt.s32.totalorder %s30, 1
        %s506 = scalar_select %p505, %s30, 1
        %s507 = scalar_lea.vmem %s5, %s506
      $region40: #{tpu_custom_call.1} parent=27 // pred_fallthru
        _
      // Predicated region
      $region41: #{tpu_custom_call.1} parent=27 // pred_check
        %p508 = pneg %p195
      $region42: #{tpu_custom_call.1} parent=27 // pred_check_branch
        %510 = sbr.rel (%p508) target = $region44
      $region43: #{tpu_custom_call.1} parent=27 // pred_region
        %p511 = scmp.lt.s32.totalorder %s30, 1
        %s512 = scalar_select %p511, %s30, 1
        %s513 = smul.addr %s512, 4
        %s514 = smul.addr %s513, 4
        %s515 = scalar_lea.vmem %s6, %s514
      $region44: #{tpu_custom_call.1} parent=27 // pred_fallthru
        _
      // Predicated region
      $region45: #{tpu_custom_call.1} parent=27 // pred_check
        %p516 = pneg %p221
      $region46: #{tpu_custom_call.1} parent=27 // pred_check_branch
        %518 = sbr.rel (%p516) target = $region48
      $region47: #{tpu_custom_call.1} parent=27 // pred_region
        %p519 = scmp.lt.s32.totalorder %s30, 1
        %s520 = scalar_select %p519, %s30, 1
        %s521 = scalar_lea.vmem %s7, %s520
      $region48: #{tpu_custom_call.1} parent=27 // pred_fallthru
        _
      // Predicated region
      $region49: #{tpu_custom_call.1} parent=27 // pred_check
        %p522 = pneg %p247
      $region50: #{tpu_custom_call.1} parent=27 // pred_check_branch
        %524 = sbr.rel (%p522) target = $region52
      $region51: #{tpu_custom_call.1} parent=27 // pred_region
        %p525 = scmp.lt.s32.totalorder %s30, 1
        %s526 = scalar_select %p525, %s30, 1
        %s527 = smul.addr %s526, 4
        %s528 = smul.addr %s527, 4
        %s529 = scalar_lea.vmem %s8, %s528
      $region52: #{tpu_custom_call.1} parent=27 // pred_fallthru
        _
      // Predicated region
      $region53: #{tpu_custom_call.1} parent=27 // pred_check
        %p530 = pneg %p273
      $region54: #{tpu_custom_call.1} parent=27 // pred_check_branch
        %532 = sbr.rel (%p530) target = $region56
      $region55: #{tpu_custom_call.1} parent=27 // pred_region
        %p533 = scmp.lt.s32.totalorder %s30, 1
        %s534 = scalar_select %p533, %s30, 1
        %s535 = scalar_lea.vmem %s9, %s534
      $region56: #{tpu_custom_call.1} parent=27 // pred_fallthru
        _
      // Predicated region
      $region57: #{tpu_custom_call.1} parent=27 // pred_check
        %p536 = pneg %p299
      $region58: #{tpu_custom_call.1} parent=27 // pred_check_branch
        %538 = sbr.rel (%p536) target = $region60
      $region59: #{tpu_custom_call.1} parent=27 // pred_region
        %p539 = scmp.lt.s32.totalorder %s30, 1
        %s540 = scalar_select %p539, %s30, 1
        %s541 = scalar_lea.vmem %s10, %s540
      $region60: #{tpu_custom_call.1} parent=27 // pred_fallthru
        _
      // Predicated region
      $region61: #{tpu_custom_call.1} parent=27 // pred_check
        %p542 = pneg %p325
      $region62: #{tpu_custom_call.1} parent=27 // pred_check_branch
        %544 = sbr.rel (%p542) target = $region64
      $region63: #{tpu_custom_call.1} parent=27 // pred_region
        %p545 = scmp.lt.s32.totalorder %s30, 1
        %s546 = scalar_select %p545, %s30, 1
        %s547 = scalar_lea.vmem %s11, %s546
      $region64: #{tpu_custom_call.1} parent=27 // pred_fallthru
        _
      // Predicated region
      $region65: #{tpu_custom_call.1} parent=27 // pred_check
        %p548 = pneg %p351
      $region66: #{tpu_custom_call.1} parent=27 // pred_check_branch
        %550 = sbr.rel (%p548) target = $region68
      $region67: #{tpu_custom_call.1} parent=27 // pred_region
        %p551 = scmp.lt.s32.totalorder %s30, 1
        %s552 = scalar_select %p551, %s30, 1
        %s553 = smul.addr %s552, 4
        %s554 = smul.addr %s553, 4
        %s555 = scalar_lea.vmem %s12, %s554
      $region68: #{tpu_custom_call.1} parent=27 // pred_fallthru
        _
      // Predicated region
      $region69: #{tpu_custom_call.1} parent=27 // pred_check
        %p556 = pneg %p377
      $region70: #{tpu_custom_call.1} parent=27 // pred_check_branch
        %558 = sbr.rel (%p556) target = $region72
      $region71: #{tpu_custom_call.1} parent=27 // pred_region
        %p559 = scmp.lt.s32.totalorder %s30, 1
        %s560 = scalar_select %p559, %s30, 1
        %s561 = scalar_lea.vmem %s13, %s560
      $region72: #{tpu_custom_call.1} parent=27 // pred_fallthru
        _
      // Predicated region
      $region73: #{tpu_custom_call.1} parent=27 // pred_check
        %p562 = pneg %p403
      $region74: #{tpu_custom_call.1} parent=27 // pred_check_branch
        %564 = sbr.rel (%p562) target = $region76
      $region75: #{tpu_custom_call.1} parent=27 // pred_region
        %p565 = scmp.lt.s32.totalorder %s30, 1
        %s566 = scalar_select %p565, %s30, 1
        %s567 = smul.addr %s566, 8
        %s568 = smul.addr %s567, 4
        %s569 = scalar_lea.vmem %s14, %s568
      $region76: #{tpu_custom_call.1} parent=27 // pred_fallthru
        _
      // Predicated region
      $region77: #{tpu_custom_call.1} parent=27 // pred_check
        %p570 = pneg %p429
      $region78: #{tpu_custom_call.1} parent=27 // pred_check_branch
        %572 = sbr.rel (%p570) target = $region80
      $region79: #{tpu_custom_call.1} parent=27 // pred_region
        %p573 = scmp.lt.s32.totalorder %s30, 1
        %s574 = scalar_select %p573, %s30, 1
        %s575 = scalar_lea.vmem %s15, %s574
      $region80: #{tpu_custom_call.1} parent=27 // pred_fallthru
        _
    $region28: #{tpu_custom_call.1} parent=5 // pred_fallthru
      _
    %p576 = scmp.le.s32.totalorder 1, %s22
    %p577 = scmp.lt.s32.totalorder %s22, 5
    %p578 = pnand %p576, %p577
    %p579 = pneg %p578
    // Predicated region
    $region81: #{tpu_custom_call.1} parent=5 // pred_check
      _
    $region82: #{tpu_custom_call.1} parent=5 // pred_check_branch
      %581 = sbr.rel (%p578) target = $region84
    $region83: #{tpu_custom_call.1} parent=5 // pred_region
      %s582 = ssub.s32 %s22, 1
      %p583 = pneg %p55
      %p584 = pneg %p52
      %p585 = scmp.lt.s32.totalorder %s31, 1
      %s586 = scalar_select %p585, %s31, 1
      %s587 = smul.addr %s586, 2
      %s588 = scalar_lea.vmem %s1, %s587
      %p589 = pneg %p81
      %p590 = pneg %p78
      %p591 = pneg %p102
      %p592 = pneg %p99
      %p593 = pneg %p123
      %p594 = pneg %p120
      %p595 = scmp.lt.s32.totalorder %s32, 1
      %s596 = scalar_select %p595, %s32, 1
      %s597 = scalar_lea.vmem %s4, %s596
      %p598 = pneg %p149
      %p599 = pneg %p146
      %p600 = scmp.lt.s32.totalorder %s32, 1
      %s601 = scalar_select %p600, %s32, 1
      %s602 = scalar_lea.vmem %s5, %s601
      %p603 = pneg %p175
      %p604 = pneg %p172
      %p605 = scmp.lt.s32.totalorder %s32, 1
      %s606 = scalar_select %p605, %s32, 1
      %s607 = smul.addr %s606, 4
      %s608 = smul.addr %s607, 4
      %s609 = scalar_lea.vmem %s6, %s608
      %p610 = pneg %p201
      %p611 = pneg %p198
      %p612 = scmp.lt.s32.totalorder %s32, 1
      %s613 = scalar_select %p612, %s32, 1
      %s614 = scalar_lea.vmem %s7, %s613
      %p615 = pneg %p227
      %p616 = pneg %p224
      %p617 = scmp.lt.s32.totalorder %s32, 1
      %s618 = scalar_select %p617, %s32, 1
      %s619 = smul.addr %s618, 4
      %s620 = smul.addr %s619, 4
      %s621 = scalar_lea.vmem %s8, %s620
      %p622 = pneg %p253
      %p623 = pneg %p250
      %p624 = scmp.lt.s32.totalorder %s32, 1
      %s625 = scalar_select %p624, %s32, 1
      %s626 = scalar_lea.vmem %s9, %s625
      %p627 = pneg %p279
      %p628 = pneg %p276
      %p629 = scmp.lt.s32.totalorder %s32, 1
      %s630 = scalar_select %p629, %s32, 1
      %s631 = scalar_lea.vmem %s10, %s630
      %p632 = pneg %p305
      %p633 = pneg %p302
      %p634 = scmp.lt.s32.totalorder %s32, 1
      %s635 = scalar_select %p634, %s32, 1
      %s636 = scalar_lea.vmem %s11, %s635
      %p637 = pneg %p331
      %p638 = pneg %p328
      %p639 = scmp.lt.s32.totalorder %s32, 1
      %s640 = scalar_select %p639, %s32, 1
      %s641 = smul.addr %s640, 4
      %s642 = smul.addr %s641, 4
      %s643 = scalar_lea.vmem %s12, %s642
      %p644 = pneg %p357
      %p645 = pneg %p354
      %p646 = scmp.lt.s32.totalorder %s32, 1
      %s647 = scalar_select %p646, %s32, 1
      %s648 = scalar_lea.vmem %s13, %s647
      %p649 = pneg %p383
      %p650 = pneg %p380
      %p651 = scmp.lt.s32.totalorder %s32, 1
      %s652 = scalar_select %p651, %s32, 1
      %s653 = smul.addr %s652, 8
      %s654 = smul.addr %s653, 4
      %s655 = scalar_lea.vmem %s14, %s654
      %p656 = pneg %p409
      %p657 = pneg %p406
      %p658 = scmp.lt.s32.totalorder %s32, 1
      %s659 = scalar_select %p658, %s32, 1
      %s660 = scalar_lea.vmem %s15, %s659
      %p661 = pneg %p435
      %p662 = pneg %p432
      %p663 = pneg %p461
      %p664 = pneg %p458
      %p665 = scmp.lt.s32.totalorder %s31, 1
      %s666 = scalar_select %p665, %s31, 1
      %s667 = smul.addr %s666, 8
      %s668 = scalar_lea.vmem %s16, %s667
      %p669 = scmp.lt.s32.totalorder %s31, 1
      %s670 = scalar_select %p669, %s31, 1
      %s671 = smul.addr %s670, 2
      %s672 = scalar_lea.vmem %s1, %s671
      %p673 = scmp.lt.s32.totalorder %s32, 1
      %s674 = scalar_select %p673, %s32, 1
      %s675 = scalar_lea.vmem %s4, %s674
      %p676 = scmp.lt.s32.totalorder %s32, 1
      %s677 = scalar_select %p676, %s32, 1
      %s678 = scalar_lea.vmem %s5, %s677
      %p679 = scmp.lt.s32.totalorder %s32, 1
      %s680 = scalar_select %p679, %s32, 1
      %s681 = smul.addr %s680, 4
      %s682 = smul.addr %s681, 4
      %s683 = scalar_lea.vmem %s6, %s682
      %p684 = scmp.lt.s32.totalorder %s32, 1
      %s685 = scalar_select %p684, %s32, 1
      %s686 = scalar_lea.vmem %s7, %s685
      %p687 = scmp.lt.s32.totalorder %s32, 1
      %s688 = scalar_select %p687, %s32, 1
      %s689 = smul.addr %s688, 4
      %s690 = smul.addr %s689, 4
      %s691 = scalar_lea.vmem %s8, %s690
      %p692 = scmp.lt.s32.totalorder %s32, 1
      %s693 = scalar_select %p692, %s32, 1
      %s694 = scalar_lea.vmem %s9, %s693
      %p695 = scmp.lt.s32.totalorder %s32, 1
      %s696 = scalar_select %p695, %s32, 1
      %s697 = scalar_lea.vmem %s10, %s696
      %p698 = scmp.lt.s32.totalorder %s32, 1
      %s699 = scalar_select %p698, %s32, 1
      %s700 = scalar_lea.vmem %s11, %s699
      %p701 = scmp.lt.s32.totalorder %s32, 1
      %s702 = scalar_select %p701, %s32, 1
      %s703 = smul.addr %s702, 4
      %s704 = smul.addr %s703, 4
      %s705 = scalar_lea.vmem %s12, %s704
      %p706 = scmp.lt.s32.totalorder %s32, 1
      %s707 = scalar_select %p706, %s32, 1
      %s708 = scalar_lea.vmem %s13, %s707
      %p709 = scmp.lt.s32.totalorder %s32, 1
      %s710 = scalar_select %p709, %s32, 1
      %s711 = smul.addr %s710, 8
      %s712 = smul.addr %s711, 4
      %s713 = scalar_lea.vmem %s14, %s712
      %p714 = scmp.lt.s32.totalorder %s32, 1
      %s715 = scalar_select %p714, %s32, 1
      %s716 = scalar_lea.vmem %s15, %s715
      %p717 = scmp.lt.s32.totalorder %s31, 1
      %s718 = scalar_select %p717, %s31, 1
      %s719 = smul.addr %s718, 8
      %s720 = scalar_lea.vmem %s16, %s719
      %p722 = scmp.eq.s32.totalorder %s32, 0
      // Predicated region
      $region85: #{tpu_custom_call.1} parent=83 // pred_check
        %p723 = pneg %p722
      $region86: #{tpu_custom_call.1} parent=83 // pred_check_branch
        %725 = sbr.rel (%p723) target = $region88
      $region87: #{tpu_custom_call.1} parent=83 // pred_region
        %v726 = vld [vmem:[%s672] sm:$0x3]
        %v727 = vld [vmem:[%s2] sm:$0xf]
        %v728 = vld [vmem:[%s2 + $0x4] sm:$0xf]
        %v729 = vld [vmem:[%s2 + $0x8] sm:$0xf]
        %v730 = vld [vmem:[%s2 + $0xc] sm:$0xf]
        %v731 = vld [vmem:[%s2 + $0x10] sm:$0xf]
        %v732 = vld [vmem:[%s2 + $0x14] sm:$0xf]
        %v733 = vld [vmem:[%s2 + $0x18] sm:$0xf]
        %v734 = vld [vmem:[%s2 + $0x1c] sm:$0xf]
        %v735 = vld [vmem:[%s3] sm:$0x1]
        %v737 = vperm.slane %v735, 0
        %v747 = vunpack.c.l.b16 %v727
        %v748 = vunpack.c.l.b16 %v728
        %v749 = vunpack.c.l.b16 %v729
        %v750 = vunpack.c.l.b16 %v730
        %v751 = vunpack.c.l.b16 %v731
        %v752 = vunpack.c.l.b16 %v732
        %v753 = vunpack.c.l.b16 %v733
        %v754 = vunpack.c.l.b16 %v734
        %v755 = vpack.c.b16 %v748, %v747
        %v756 = vpack.c.b16 %v750, %v749
        %v757 = vpack.c.b16 %v752, %v751
        %v758 = vpack.c.b16 %v754, %v753
        %vm763 = vcmask 523264
        %v765 = vsel %vm763, %v726, 0
        %767 = vmatpush.bf16.msra.mxu0 0
        %768 = vmatpush.bf16.msra.mxu0 0
        %769 = vmatpush.bf16.msra.mxu0 0
        %770 = vmatpush.bf16.msra.mxu0 0
        %771 = vmatpush.bf16.msra.mxu0 %v758
        %772 = vmatpush.bf16.msra.mxu0 %v757
        %773 = vmatpush.bf16.msra.mxu0 %v756
        %774 = vmatpush.bf16.msra.mxu0 %v755
        %775 = vmatmul.bf16.gmra.mxu0 %v765
        %v776 = vpop.f32.mrf.mxu0
        %v777 = vadd.f32 %v737, %v776
        %v778 = vpop.f32.mrf.mxu0
        %779 = vdwg.mxu0
        %v781 = vrot.slane %v777, 6
        %vm783 = vcmask 1041408
        %v784 = vsel %vm783, 0.0, %v781
        %v785 = vld [vmem:[%s0] sm:$0x3f]
        %v786 = vadd.f32 %v785, %v784
        %vm787 = vcmask 259072
        %788 = vst.msk [vmem:[%s720] sm:$0x3f] %vm787, %v786
      $region88: #{tpu_custom_call.1} parent=83 // pred_fallthru
        _
      %v789 = vld [vmem:[%s720] sm:$0x3f]
      %v790 = vld [vmem:[%s675] sm:$0x1]
      %v791 = vld [vmem:[%s678] sm:$0x1]
      %vm792 = vcmask 259072
      %v793 = vsel %vm792, %v789, 0.0
      %794 = vadd.xlane.f32.xlu0 %v793
      %v795 = vpop.xlane.xlu0 %794
      %v796 = vrcp.pop 32.0
      %v797 = vmul.f32 32.0, %v796
      %v798 = vsub.f32 1.0, %v797
      %v799 = vmul.f32 %v796, %v798
      %v800 = vadd.f32 %v796, %v799
      %vm801 = vweird.f32 %v796
      %v802 = vsel %vm801, %v796, %v800
      %v803 = vmul.f32 %v795, %v802
      %v804 = vsub.f32 %v789, %v803
      %v805 = vmul.f32 %v804, %v804
      %v806 = vsel %vm792, %v805, 0.0
      %807 = vadd.xlane.f32.xlu0 %v806
      %v808 = vpop.xlane.xlu0 %807
      %v809 = vmul.f32 %v808, %v802
      %v810 = vadd.f32 %v809, 1e-12
      %v811 = vrsqrt.pop %v810
      %v812 = vmul.f32 %v811, %v810
      %v813 = vmul.f32 %v812, %v811
      %v814 = vmul.f32 0.5, %v813
      %v815 = vsub.f32 1.5, %v814
      %v816 = vmul.f32 %v811, %v815
      %vm817 = vweird.f32 %v810
      %vm818 = vweird.f32 %v811
      %vm819 = vmor %vm817, %vm818
      %v820 = vsel %vm819, %v811, %v816
      %v821 = vmul.f32 %v804, %v820
      %v823 = vperm.slane %v790, 0
      %v825 = vmul.f32 %v821, %v823
      %v827 = vperm.slane %v791, 0
      %v829 = vadd.f32 %v825, %v827
      %v830 = vpack.c.bf16 %v829, %v829
      %v831 = vld [vmem:[%s683] sm:$0xf]
      %v832 = vld [vmem:[%s683 + $0x4] sm:$0xf]
      %v833 = vld [vmem:[%s683 + $0x8] sm:$0xf]
      %v834 = vld [vmem:[%s683 + $0xc] sm:$0xf]
      %v835 = vld [vmem:[%s686] sm:$0x1]
      %v837 = vperm.slane %v835, 0
      %v843 = vunpack.c.l.b16 %v831
      %v844 = vunpack.c.l.b16 %v832
      %v845 = vunpack.c.l.b16 %v833
      %v846 = vunpack.c.l.b16 %v834
      %v847 = vpack.c.b16 %v844, %v843
      %v848 = vpack.c.b16 %v846, %v845
      %vm851 = vcmask 261120
      %v853 = vsel %vm851, %v830, 0
      %855 = vmatpush.bf16.msra.mxu0 0
      %856 = vmatpush.bf16.msra.mxu0 0
      %857 = vmatpush.bf16.msra.mxu0 0
      %858 = vmatpush.bf16.msra.mxu0 0
      %859 = vmatpush.bf16.msra.mxu0 0
      %860 = vmatpush.bf16.msra.mxu0 0
      %861 = vmatpush.bf16.msra.mxu0 %v848
      %862 = vmatpush.bf16.msra.mxu0 %v847
      %863 = vmatmul.bf16.gmra.mxu0 %v853
      %v864 = vpop.f32.mrf.mxu0
      %v865 = vadd.f32 %v837, %v864
      %v866 = vpop.f32.mrf.mxu0
      %867 = vdwg.mxu0
      %869 = vrot.lane.b32.xlu0 %v865, 112
      %v870 = vpop.permute.xlu0 %869
      %v872 = vpack.c.bf16 %v865, %v865
      %v873 = vpack.c.bf16 %v870, %v870
      %v875 = vunpack.c.l.b16 %v872
      %v876 = vpack.c.b16 %v875, %v875
      %877 = vrot.lane.b32.xlu0 %v876, 96
      %v878 = vpop.permute.xlu0 %877
      %vm879 = vcmask 130048
      %v881 = vsel %vm879, %v872, 0
      %v884 = vsel %vm879, %v878, 0
      %886 = vmatpush.bf16.xpose.msra.mxu0 0
      %887 = vmatpush.bf16.xpose.msra.mxu0 0
      %888 = vmatpush.bf16.xpose.msra.mxu0 0
      %889 = vmatpush.bf16.xpose.msra.mxu0 0
      %890 = vmatpush.bf16.xpose.msra.mxu0 0
      %891 = vmatpush.bf16.xpose.msra.mxu0 0
      %892 = vmatpush.bf16.xpose.msra.mxu0 0
      %893 = vmatpush.bf16.xpose.msra.mxu0 %v884
      %894 = vmatmul.bf16.gmra.mxu0 %v881
      %v895 = vpop.f32.mrf.mxu0
      %v896 = vadd.f32 0.0, %v895
      %v897 = vpop.f32.mrf.mxu0
      %898 = vdwg.mxu0
      %v900 = vunpack.c.l.b16 %v873
      %v901 = vpack.c.b16 %v900, %v900
      %902 = vrot.lane.b32.xlu0 %v901, 96
      %v903 = vpop.permute.xlu0 %902
      %v905 = vsel %vm879, %v873, 0
      %v908 = vsel %vm879, %v903, 0
      %910 = vmatpush.bf16.xpose.msra.mxu0 0
      %911 = vmatpush.bf16.xpose.msra.mxu0 0
      %912 = vmatpush.bf16.xpose.msra.mxu0 0
      %913 = vmatpush.bf16.xpose.msra.mxu0 0
      %914 = vmatpush.bf16.xpose.msra.mxu0 0
      %915 = vmatpush.bf16.xpose.msra.mxu0 0
      %916 = vmatpush.bf16.xpose.msra.mxu0 0
      %917 = vmatpush.bf16.xpose.msra.mxu0 %v908
      %918 = vmatmul.bf16.gmra.mxu0 %v905
      %v919 = vpop.f32.mrf.mxu0
      %v920 = vadd.f32 0.0, %v919
      %v921 = vpop.f32.mrf.mxu0
      %922 = vdwg.mxu0
      %v923 = vmul.f32 %v896, 0.25
      %v924 = vmul.f32 %v920, 0.25
      %vm925 = vcmask 46080
      %v926 = vsel %vm925, %v923, -inf
      %927 = vmax.xlane.f32.xlu0 %v926
      %v928 = vpop.xlane.xlu0 %927
      %v929 = vsel %vm925, %v924, -inf
      %930 = vmax.xlane.f32.xlu0 %v929
      %v931 = vpop.xlane.xlu0 %930
      %v932 = vsub.f32 %v923, %v928
      %v933 = vsub.f32 %v924, %v931
      %v934 = vmul.f32 %v932, 1.442695
      %v935 = vpow.pop %v934
      %v936 = vmul.f32 %v933, 1.442695
      %v937 = vpow.pop %v936
      %v938 = vsel %vm925, %v935, 0.0
      %939 = vadd.xlane.f32.xlu0 %v938
      %v940 = vpop.xlane.xlu0 %939
      %v941 = vsel %vm925, %v937, 0.0
      %942 = vadd.xlane.f32.xlu0 %v941
      %v943 = vpop.xlane.xlu0 %942
      %v944 = vrcp.pop %v940
      %v945 = vrcp.pop %v943
      %v946 = vmul.f32 %v935, %v944
      %v947 = vmul.f32 %v937, %v945
      %v948 = vpack.c.bf16 %v946, %v946
      %v949 = vpack.c.bf16 %v947, %v947
      %950 = vrot.lane.b32.xlu0 %v876, 64
      %v951 = vpop.permute.xlu0 %950
      %vm952 = vcmask 48128
      %v954 = vsel %vm952, %v948, 0
      %vm956 = vcmask 1042432
      %v958 = vsel %vm956, %v951, 0
      %960 = vmatpush.bf16.msra.mxu0 0
      %961 = vmatpush.bf16.msra.mxu0 0
      %962 = vmatpush.bf16.msra.mxu0 0
      %963 = vmatpush.bf16.msra.mxu0 0
      %964 = vmatpush.bf16.msra.mxu0 0
      %965 = vmatpush.bf16.msra.mxu0 0
      %966 = vmatpush.bf16.msra.mxu0 0
      %967 = vmatpush.bf16.msra.mxu0 %v958
      %968 = vmatmul.bf16.gmra.mxu0 %v954
      %v969 = vpop.f32.mrf.mxu0
      %v970 = vadd.f32 0.0, %v969
      %v971 = vpop.f32.mrf.mxu0
      %972 = vdwg.mxu0
      %973 = vrot.lane.b32.xlu0 %v901, 64
      %v974 = vpop.permute.xlu0 %973
      %v976 = vsel %vm952, %v949, 0
      %v979 = vsel %vm956, %v974, 0
      %981 = vmatpush.bf16.msra.mxu0 0
      %982 = vmatpush.bf16.msra.mxu0 0
      %983 = vmatpush.bf16.msra.mxu0 0
      %984 = vmatpush.bf16.msra.mxu0 0
      %985 = vmatpush.bf16.msra.mxu0 0
      %986 = vmatpush.bf16.msra.mxu0 0
      %987 = vmatpush.bf16.msra.mxu0 0
      %988 = vmatpush.bf16.msra.mxu0 %v979
      %989 = vmatmul.bf16.gmra.mxu0 %v976
      %v990 = vpop.f32.mrf.mxu0
      %v991 = vadd.f32 0.0, %v990
      %v992 = vpop.f32.mrf.mxu0
      %993 = vdwg.mxu0
      %995 = vrot.lane.b32.xlu0 %v991, 16
      %v996 = vpop.permute.xlu0 %995
      %v998 = vsel %vm879, %v970, %v996
      %v999 = vpack.c.bf16 %v998, %v998
      %v1000 = vld [vmem:[%s691] sm:$0xf]
      %v1001 = vld [vmem:[%s691 + $0x4] sm:$0xf]
      %v1002 = vld [vmem:[%s691 + $0x8] sm:$0xf]
      %v1003 = vld [vmem:[%s691 + $0xc] sm:$0xf]
      %v1004 = vld [vmem:[%s694] sm:$0x1]
      %v1006 = vperm.slane %v1004, 0
      %v1012 = vunpack.c.l.b16 %v1000
      %v1013 = vunpack.c.l.b16 %v1001
      %v1014 = vunpack.c.l.b16 %v1002
      %v1015 = vunpack.c.l.b16 %v1003
      %v1016 = vpack.c.b16 %v1013, %v1012
      %v1017 = vpack.c.b16 %v1015, %v1014
      %v1021 = vsel %vm851, %v999, 0
      %1023 = vmatpush.bf16.msra.mxu0 0
      %1024 = vmatpush.bf16.msra.mxu0 0
      %1025 = vmatpush.bf16.msra.mxu0 0
      %1026 = vmatpush.bf16.msra.mxu0 0
      %1027 = vmatpush.bf16.msra.mxu0 0
      %1028 = vmatpush.bf16.msra.mxu0 0
      %1029 = vmatpush.bf16.msra.mxu0 %v1017
      %1030 = vmatpush.bf16.msra.mxu0 %v1016
      %1031 = vmatmul.bf16.gmra.mxu0 %v1021
      %v1032 = vpop.f32.mrf.mxu0
      %v1033 = vadd.f32 %v1006, %v1032
      %v1034 = vpop.f32.mrf.mxu0
      %1035 = vdwg.mxu0
      %v1036 = vadd.f32 %v789, %v1033
      %v1037 = vld [vmem:[%s697] sm:$0x1]
      %v1038 = vld [vmem:[%s700] sm:$0x1]
      %v1039 = vsel %vm792, %v1036, 0.0
      %1040 = vadd.xlane.f32.xlu0 %v1039
      %v1041 = vpop.xlane.xlu0 %1040
      %v1042 = vmul.f32 %v1041, %v802
      %v1043 = vsub.f32 %v1036, %v1042
      %v1044 = vmul.f32 %v1043, %v1043
      %v1045 = vsel %vm792, %v1044, 0.0
      %1046 = vadd.xlane.f32.xlu0 %v1045
      %v1047 = vpop.xlane.xlu0 %1046
      %v1048 = vmul.f32 %v1047, %v802
      %v1049 = vadd.f32 %v1048, 1e-12
      %v1050 = vrsqrt.pop %v1049
      %v1051 = vmul.f32 %v1050, %v1049
      %v1052 = vmul.f32 %v1051, %v1050
      %v1053 = vmul.f32 0.5, %v1052
      %v1054 = vsub.f32 1.5, %v1053
      %v1055 = vmul.f32 %v1050, %v1054
      %vm1056 = vweird.f32 %v1049
      %vm1057 = vweird.f32 %v1050
      %vm1058 = vmor %vm1056, %vm1057
      %v1059 = vsel %vm1058, %v1050, %v1055
      %v1060 = vmul.f32 %v1043, %v1059
      %v1062 = vperm.slane %v1037, 0
      %v1064 = vmul.f32 %v1060, %v1062
      %v1066 = vperm.slane %v1038, 0
      %v1068 = vadd.f32 %v1064, %v1066
      %v1069 = vpack.c.bf16 %v1068, %v1068
      %v1070 = vld [vmem:[%s705] sm:$0xf]
      %v1071 = vld [vmem:[%s705 + $0x4] sm:$0xf]
      %v1072 = vld [vmem:[%s705 + $0x8] sm:$0xf]
      %v1073 = vld [vmem:[%s705 + $0xc] sm:$0xf]
      %v1074 = vld [vmem:[%s708] sm:$0x1]
      %v1076 = vperm.slane %v1074, 0
      %v1082 = vunpack.c.l.b16 %v1070
      %v1083 = vunpack.c.l.b16 %v1071
      %v1084 = vunpack.c.l.b16 %v1072
      %v1085 = vunpack.c.l.b16 %v1073
      %v1086 = vpack.c.b16 %v1083, %v1082
      %v1087 = vpack.c.b16 %v1085, %v1084
      %v1091 = vsel %vm851, %v1069, 0
      %1093 = vmatpush.bf16.msra.mxu0 0
      %1094 = vmatpush.bf16.msra.mxu0 0
      %1095 = vmatpush.bf16.msra.mxu0 0
      %1096 = vmatpush.bf16.msra.mxu0 0
      %1097 = vmatpush.bf16.msra.mxu0 0
      %1098 = vmatpush.bf16.msra.mxu0 0
      %1099 = vmatpush.bf16.msra.mxu0 %v1087
      %1100 = vmatpush.bf16.msra.mxu0 %v1086
      %1101 = vmatmul.bf16.gmra.mxu0 %v1091
      %v1102 = vpop.f32.mrf.mxu0
      %v1103 = vadd.f32 %v1076, %v1102
      %v1104 = vpop.f32.mrf.mxu0
      %1105 = vdwg.mxu0
      %v1106 = vmul.f32 %v1103, %v1103
      %v1107 = vmul.f32 %v1103, %v1106
      %v1108 = vmul.f32 %v1107, 0.044715
      %v1109 = vadd.f32 %v1103, %v1108
      %v1110 = vmul.f32 %v1109, 0.7978846
      %v1111 = vtanh.pop %v1110
      %v1112 = vadd.f32 %v1111, 1.0
      %v1113 = vmul.f32 %v1112, 0.5
      %v1114 = vmul.f32 %v1103, %v1113
      %v1115 = vpack.c.bf16 %v1114, %v1114
      %v1116 = vld [vmem:[%s713] sm:$0xf]
      %v1117 = vld [vmem:[%s713 + $0x4] sm:$0xf]
      %v1118 = vld [vmem:[%s713 + $0x8] sm:$0xf]
      %v1119 = vld [vmem:[%s713 + $0xc] sm:$0xf]
      %v1120 = vld [vmem:[%s713 + $0x10] sm:$0xf]
      %v1121 = vld [vmem:[%s713 + $0x14] sm:$0xf]
      %v1122 = vld [vmem:[%s713 + $0x18] sm:$0xf]
      %v1123 = vld [vmem:[%s713 + $0x1c] sm:$0xf]
      %v1124 = vld [vmem:[%s716] sm:$0x1]
      %v1126 = vperm.slane %v1124, 0
      %v1136 = vunpack.c.l.b16 %v1116
      %v1137 = vunpack.c.l.b16 %v1117
      %v1138 = vunpack.c.l.b16 %v1118
      %v1139 = vunpack.c.l.b16 %v1119
      %v1140 = vunpack.c.l.b16 %v1120
      %v1141 = vunpack.c.l.b16 %v1121
      %v1142 = vunpack.c.l.b16 %v1122
      %v1143 = vunpack.c.l.b16 %v1123
      %v1144 = vpack.c.b16 %v1137, %v1136
      %v1145 = vpack.c.b16 %v1139, %v1138
      %v1146 = vpack.c.b16 %v1141, %v1140
      %v1147 = vpack.c.b16 %v1143, %v1142
      %vm1152 = vcmask 523264
      %v1154 = vsel %vm1152, %v1115, 0
      %1156 = vmatpush.bf16.msra.mxu0 0
      %1157 = vmatpush.bf16.msra.mxu0 0
      %1158 = vmatpush.bf16.msra.mxu0 0
      %1159 = vmatpush.bf16.msra.mxu0 0
      %1160 = vmatpush.bf16.msra.mxu0 %v1147
      %1161 = vmatpush.bf16.msra.mxu0 %v1146
      %1162 = vmatpush.bf16.msra.mxu0 %v1145
      %1163 = vmatpush.bf16.msra.mxu0 %v1144
      %1164 = vmatmul.bf16.gmra.mxu0 %v1154
      %v1165 = vpop.f32.mrf.mxu0
      %v1166 = vadd.f32 %v1126, %v1165
      %v1167 = vpop.f32.mrf.mxu0
      %1168 = vdwg.mxu0
      %v1169 = vadd.f32 %v1036, %v1166
      %1170 = vst.msk [vmem:[%s720] sm:$0x3f] %vm792, %v1169
      %p1171 = scmp.lt.s32.totalorder %s31, 1
      %s1172 = scalar_select %p1171, %s31, 1
      %s1173 = smul.addr %s1172, 8
      %s1174 = scalar_lea.vmem %s16, %s1173
      // Predicated region
      $region89: #{tpu_custom_call.1} parent=83 // pred_check
        %p1175 = pneg %p458
      $region90: #{tpu_custom_call.1} parent=83 // pred_check_branch
        %1177 = sbr.rel (%p1175) target = $region92
      $region91: #{tpu_custom_call.1} parent=83 // pred_region
        _
      $region92: #{tpu_custom_call.1} parent=83 // pred_fallthru
        _
    $region84: #{tpu_custom_call.1} parent=5 // pred_fallthru
      _
    %p1178 = scmp.le.s32.totalorder 2, %s22
    // Predicated region
    $region93: #{tpu_custom_call.1} parent=5 // pred_check
      %p1179 = pneg %p1178
    $region94: #{tpu_custom_call.1} parent=5 // pred_check_branch
      %1181 = sbr.rel (%p1179) target = $region96
    $region95: #{tpu_custom_call.1} parent=5 // pred_region
      %s1182 = ssub.s32 %s22, 2
      // Predicated region
      $region97: #{tpu_custom_call.1} parent=95 // pred_check
        %p1183 = pneg %p464
      $region98: #{tpu_custom_call.1} parent=95 // pred_check_branch
        %1185 = sbr.rel (%p1183) target = $region100
      $region99: #{tpu_custom_call.1} parent=95 // pred_region
        %p1186 = scmp.lt.s32.totalorder %s33, 1
        %s1187 = scalar_select %p1186, %s33, 1
        %s1188 = smul.addr %s1187, 8
        %s1189 = scalar_lea.vmem %s16, %s1188
      $region100: #{tpu_custom_call.1} parent=95 // pred_fallthru
        _
    $region96: #{tpu_custom_call.1} parent=5 // pred_fallthru
      _
  $region6: #{tpu_custom_call.1} parent=0 // loop_footer
    %s26 = sadd.s32 1, %s22
  $region7: #{tpu_custom_call.1} parent=0 // loop_footer_branch
    %21 = sbr.rel target = $region3
  $region8: #{tpu_custom_call.1} parent=0 // loop_exit
    _

</llo_original>
